<compile_context>
chip_gen: v7x
topology: tpu7x:2x2x1
jax: 0.10.0
libtpu: 0.0.40
codegen_flags: <defaults>
</compile_context>

<pallas_src>
import functools
import math

import jax
import jax.numpy as jnp
from jax import lax
from jax.experimental import pallas as pl
from jax.experimental.pallas import tpu as pltpu


def _fna_kernel(x_ref, wq_ref, bq_ref, wk_ref, bk_ref, wv_ref, bv_ref,
                wo_ref, bo_ref, o_ref, *,
                scale, kernel_size, dilation, num_heads, head_dim,
                q_tile, window, pad, seq_len, aligned):
    """One (batch, q-tile) grid step.

    x_ref  : (1, S, H)   full sequence of one batch element (constant index over
                         q-tiles -> DMA'd once per batch by the pipeline).
    w*_ref : (H, H)      projection weights, pre-transposed (x @ W.T == x @ w*_ref).
    b*_ref : (1, H)
    o_ref  : (1, q_tile, H)  lane-dense output tile (out_proj already applied).
    """
    in_dtype = x_ref.dtype
    qi = pl.program_id(1)
    q_start = qi * q_tile

    # k/v window covering every neighbor of this q tile (clamped, 8-aligned).
    win_start = jnp.maximum(q_start - pad, 0)
    win_start = jnp.minimum(win_start, seq_len - window)
    if aligned:
        win_start = pl.multiple_of(win_start, 8)

    x_win = x_ref[0, pl.ds(win_start, window), :]         # (window, H)
    x_q = x_ref[0, pl.ds(q_start, q_tile), :]             # (q_tile, H)

    # All-heads projections, one MXU pass each (N = H, lane dense).
    k = (jnp.dot(x_win, wk_ref[...], preferred_element_type=jnp.float32)
         + bk_ref[...]).astype(in_dtype)                   # (window, H)
    v = (jnp.dot(x_win, wv_ref[...], preferred_element_type=jnp.float32)
         + bv_ref[...]).astype(in_dtype)                   # (window, H)
    q = (jnp.dot(x_q, wq_ref[...], preferred_element_type=jnp.float32)
         + bq_ref[...])
    q = (q * scale).astype(in_dtype)                       # fold scale into q

    # Band mask in absolute coordinates — only (q_tile, window), never S x S.
    q_pos = q_start + lax.broadcasted_iota(jnp.int32, (q_tile, window), 0)
    k_pos = win_start + lax.broadcasted_iota(jnp.int32, (q_tile, window), 1)
    diff = jnp.abs(q_pos - k_pos)
    half_span = (kernel_size // 2) * dilation
    mask = diff <= half_span
    if dilation > 1:
        mask = jnp.logical_and(mask, (diff % dilation) == 0)
    neg = jnp.float32(-1e30)

    outs = []
    for h in range(num_heads):
        sl = slice(h * head_dim, (h + 1) * head_dim)
        # scores: contract head_dim without materializing a transpose.
        s = lax.dot_general(q[:, sl], k[:, sl],
                            (((1,), (1,)), ((), ())),
                            preferred_element_type=jnp.float32)  # (q_tile, window)
        s = jnp.where(mask, s, neg)
        m = jnp.max(s, axis=-1, keepdims=True)
        p = jnp.exp(s - m)
        denom = jnp.sum(p, axis=-1, keepdims=True)
        p = p * pl.reciprocal(denom, approx=True)
        outs.append(jnp.dot(p.astype(in_dtype), v[:, sl],
                            preferred_element_type=jnp.float32))  # (q_tile, hd)

    # Merge heads and apply the output projection in-kernel (no HBM round trip).
    o_merged = jnp.concatenate(outs, axis=-1).astype(in_dtype)    # (q_tile, H)
    y = jnp.dot(o_merged, wo_ref[...],
                preferred_element_type=jnp.float32) + bo_ref[...]
    o_ref[0] = y.astype(o_ref.dtype)


def _pick_q_tile(seq_len, desired=256):
    if seq_len <= desired:
        return seq_len
    for t in range(desired, 7, -1):
        if seq_len % t == 0 and t % 8 == 0:
            return t
    return seq_len


def fused_neighborhood_attention(x, params, *, num_heads, kernel_size,
                                 dilation=1, scale=None, q_tile=None):
    B, S, H = x.shape
    head_dim = H // num_heads
    if scale is None:
        scale = 1.0 / math.sqrt(head_dim)

    tq = _pick_q_tile(S) if q_tile is None else q_tile
    assert S % tq == 0, "sequence length must be divisible by the q tile"
    n_qt = S // tq

    half_span = (kernel_size // 2) * dilation
    pad = ((half_span + 7) // 8) * 8 if half_span > 0 else 0   # 8-aligned halo
    window = min(tq + 2 * pad, S)
    aligned = (tq % 8 == 0 and S % 8 == 0 and pad % 8 == 0 and window % 8 == 0)

    # torch Linear: y = x @ W.T + b  (W: [out, in]) -> pass W.T as [H, H].
    wq_t, wk_t = params["wq"].T, params["wk"].T
    wv_t, wo_t = params["wv"].T, params["wo"].T
    bq = params["bq"].reshape(1, H)
    bk = params["bk"].reshape(1, H)
    bv = params["bv"].reshape(1, H)
    bo = params["bo"].reshape(1, H)

    kernel = functools.partial(
        _fna_kernel, scale=scale, kernel_size=kernel_size, dilation=dilation,
        num_heads=num_heads, head_dim=head_dim, q_tile=tq, window=window,
        pad=pad, seq_len=S, aligned=aligned)

    full_w = pl.BlockSpec((H, H), lambda b, qi: (0, 0))   # VMEM-resident weights
    full_b = pl.BlockSpec((1, H), lambda b, qi: (0, 0))

    return pl.pallas_call(
        kernel,
        out_shape=jax.ShapeDtypeStruct((B, S, H), x.dtype),
        grid=(B, n_qt),
        in_specs=[
            pl.BlockSpec((1, S, H), lambda b, qi: (b, 0, 0)),  # x (once per batch)
            full_w, full_b,      # q_proj
            full_w, full_b,      # k_proj
            full_w, full_b,      # v_proj
            full_w, full_b,      # out_proj
        ],
        out_specs=pl.BlockSpec((1, tq, H), lambda b, qi: (b, qi, 0)),
        compiler_params=pltpu.CompilerParams(
            dimension_semantics=("parallel", "parallel"),
            vmem_limit_bytes=48 * 1024 * 1024),
    )(x, wq_t, bq, wk_t, bk, wv_t, bv, wo_t, bo)


def _reference(x, params, *, num_heads, kernel_size, dilation, scale):
    """Pure-JAX reference of the same forward pass (for correctness check)."""
    B, S, H = x.shape
    hd = H // num_heads
    q = x @ params["wq"].T + params["bq"]
    k = x @ params["wk"].T + params["bk"]
    v = x @ params["wv"].T + params["bv"]

    def heads(t):
        return t.reshape(B, S, num_heads, hd).transpose(0, 2, 1, 3)

    q, k, v = heads(q), heads(k), heads(v)
    scores = jnp.einsum("bhqd,bhkd->bhqk", q, k) * scale
    i = jnp.arange(S)[:, None]
    j = jnp.arange(S)[None, :]
    diff = jnp.abs(i - j)
    mask = diff <= (kernel_size // 2) * dilation
    if dilation > 1:
        mask = jnp.logical_and(mask, (diff % dilation) == 0)
    scores = jnp.where(mask, scores, -jnp.inf)
    attn = jax.nn.softmax(scores, axis=-1)
    out = jnp.einsum("bhqk,bhkd->bhqd", attn, v)
    out = out.transpose(0, 2, 1, 3).reshape(B, S, H)
    return out @ params["wo"].T + params["bo"]


def _init_linear(key, in_f, out_f):
    kw, kb = jax.random.split(key)
    bound = 1.0 / math.sqrt(in_f)
    w = jax.random.uniform(kw, (out_f, in_f), jnp.float32, -bound, bound)
    b = jax.random.uniform(kb, (out_f,), jnp.float32, -bound, bound)
    return w, b


if __name__ == "__main__":
    batch_size, seq_len, hidden_size = 2, 16, 64
    num_heads = 4
    head_dim = hidden_size // num_heads

    root = jax.random.PRNGKey(0)
    kx, kq, kk, kv, ko = jax.random.split(root, 5)
    x = jax.random.normal(kx, (batch_size, seq_len, hidden_size), jnp.float32)

    wq, bq = _init_linear(kq, hidden_size, hidden_size)
    wk, bk = _init_linear(kk, hidden_size, hidden_size)
    wv, bv = _init_linear(kv, hidden_size, hidden_size)
    wo, bo = _init_linear(ko, hidden_size, hidden_size)
    params = dict(wq=wq, bq=bq, wk=wk, bk=bk, wv=wv, bv=bv, wo=wo, bo=bo)

    ok = True
    for kernel_size, dilation in ((5, 1), (3, 2)):
        scale = 1.0 / math.sqrt(head_dim)
        out = fused_neighborhood_attention(
            x, params, num_heads=num_heads, kernel_size=kernel_size,
            dilation=dilation, scale=scale)
        out = jax.block_until_ready(out)
        ref = _reference(x, params, num_heads=num_heads, kernel_size=kernel_size,
                         dilation=dilation, scale=scale)
        assert out.shape == (batch_size, seq_len, hidden_size)
        ok &= bool(jnp.allclose(out, ref, atol=2e-3, rtol=2e-3))

    assert ok, "mismatch vs JAX reference"
    print("KERNEL_OK")
</pallas_src>

<mosaic_0001>
module attributes {stable_mosaic.version = 11 : i64} {
  func.func @_fna_kernel(%arg0: i32, %arg1: i32, %arg2: memref<1x16x64xf32, #tpu.memory_space<vmem>>, %arg3: memref<64x64xf32, #tpu.memory_space<vmem>>, %arg4: memref<1x64xf32, #tpu.memory_space<vmem>>, %arg5: memref<64x64xf32, #tpu.memory_space<vmem>>, %arg6: memref<1x64xf32, #tpu.memory_space<vmem>>, %arg7: memref<64x64xf32, #tpu.memory_space<vmem>>, %arg8: memref<1x64xf32, #tpu.memory_space<vmem>>, %arg9: memref<64x64xf32, #tpu.memory_space<vmem>>, %arg10: memref<1x64xf32, #tpu.memory_space<vmem>>, %arg11: memref<1x16x64xf32, #tpu.memory_space<vmem>>) attributes {dimension_semantics = [#tpu.dimension_semantics<parallel>, #tpu.dimension_semantics<parallel>], iteration_bounds = array<i64: 2, 1>, scalar_prefetch = 0 : i64, scratch_operands = 0 : i64, tpu.core_type = #tpu.core_type<tc>, window_params = [{transform_indices = @transform_0, window_bounds = array<i64: 1, 16, 64>}, {pipeline_mode = #tpu.pipeline_mode<synchronous>, transform_indices = @transform_1, window_bounds = array<i64: 64, 64>}, {pipeline_mode = #tpu.pipeline_mode<synchronous>, transform_indices = @transform_2, window_bounds = array<i64: 1, 64>}, {pipeline_mode = #tpu.pipeline_mode<synchronous>, transform_indices = @transform_3, window_bounds = array<i64: 64, 64>}, {pipeline_mode = #tpu.pipeline_mode<synchronous>, transform_indices = @transform_4, window_bounds = array<i64: 1, 64>}, {pipeline_mode = #tpu.pipeline_mode<synchronous>, transform_indices = @transform_5, window_bounds = array<i64: 64, 64>}, {pipeline_mode = #tpu.pipeline_mode<synchronous>, transform_indices = @transform_6, window_bounds = array<i64: 1, 64>}, {pipeline_mode = #tpu.pipeline_mode<synchronous>, transform_indices = @transform_7, window_bounds = array<i64: 64, 64>}, {pipeline_mode = #tpu.pipeline_mode<synchronous>, transform_indices = @transform_8, window_bounds = array<i64: 1, 64>}, {transform_indices = @transform_9, window_bounds = array<i64: 1, 16, 64>}]} {
    %c16_i32 = arith.constant 16 : i32
    %0 = arith.muli %arg1, %c16_i32 : i32
    %c8_i32 = arith.constant 8 : i32
    %1 = arith.subi %0, %c8_i32 : i32
    %c0_i32 = arith.constant 0 : i32
    %2 = arith.maxsi %1, %c0_i32 : i32
    %c0_i32_0 = arith.constant 0 : i32
    %3 = arith.minsi %2, %c0_i32_0 : i32
    %4 = tpu.assume_multiple %3, 8 : i32
    %c0 = arith.constant 0 : index
    %5 = arith.index_cast %4 : i32 to index
    %c0_1 = arith.constant 0 : index
    %6 = vector.load %arg2[%c0, %5, %c0_1] : memref<1x16x64xf32, #tpu.memory_space<vmem>>, vector<1x16x64xf32>
    %7 = vector.shape_cast %6 : vector<1x16x64xf32> to vector<16x64xf32>
    %c0_2 = arith.constant 0 : index
    %8 = arith.index_cast %0 : i32 to index
    %c0_3 = arith.constant 0 : index
    %9 = vector.load %arg2[%c0_2, %8, %c0_3] : memref<1x16x64xf32, #tpu.memory_space<vmem>>, vector<1x16x64xf32>
    %10 = vector.shape_cast %9 : vector<1x16x64xf32> to vector<16x64xf32>
    %c0_4 = arith.constant 0 : index
    %c0_5 = arith.constant 0 : index
    %11 = vector.load %arg5[%c0_4, %c0_5] : memref<64x64xf32, #tpu.memory_space<vmem>>, vector<64x64xf32>
    %cst = arith.constant dense<0.000000e+00> : vector<16x64xf32>
    %12 = tpu.matmul %7, %11, %cst {dimension_numbers = #tpu.dot_dimension_numbers<[1], [0], [0], [1], [0, 0, 1, 1], [], []>} : vector<16x64xf32>, vector<64x64xf32>, vector<16x64xf32> -> vector<16x64xf32>
    %c0_6 = arith.constant 0 : index
    %c0_7 = arith.constant 0 : index
    %13 = vector.load %arg6[%c0_6, %c0_7] : memref<1x64xf32, #tpu.memory_space<vmem>>, vector<1x64xf32>
    %14 = vector.broadcast %13 : vector<1x64xf32> to vector<16x64xf32>
    %15 = arith.addf %12, %14 : vector<16x64xf32>
    %c0_8 = arith.constant 0 : index
    %c0_9 = arith.constant 0 : index
    %16 = vector.load %arg7[%c0_8, %c0_9] : memref<64x64xf32, #tpu.memory_space<vmem>>, vector<64x64xf32>
    %cst_10 = arith.constant dense<0.000000e+00> : vector<16x64xf32>
    %17 = tpu.matmul %7, %16, %cst_10 {dimension_numbers = #tpu.dot_dimension_numbers<[1], [0], [0], [1], [0, 0, 1, 1], [], []>} : vector<16x64xf32>, vector<64x64xf32>, vector<16x64xf32> -> vector<16x64xf32>
    %c0_11 = arith.constant 0 : index
    %c0_12 = arith.constant 0 : index
    %18 = vector.load %arg8[%c0_11, %c0_12] : memref<1x64xf32, #tpu.memory_space<vmem>>, vector<1x64xf32>
    %19 = vector.broadcast %18 : vector<1x64xf32> to vector<16x64xf32>
    %20 = arith.addf %17, %19 : vector<16x64xf32>
    %c0_13 = arith.constant 0 : index
    %c0_14 = arith.constant 0 : index
    %21 = vector.load %arg3[%c0_13, %c0_14] : memref<64x64xf32, #tpu.memory_space<vmem>>, vector<64x64xf32>
    %cst_15 = arith.constant dense<0.000000e+00> : vector<16x64xf32>
    %22 = tpu.matmul %10, %21, %cst_15 {dimension_numbers = #tpu.dot_dimension_numbers<[1], [0], [0], [1], [0, 0, 1, 1], [], []>} : vector<16x64xf32>, vector<64x64xf32>, vector<16x64xf32> -> vector<16x64xf32>
    %c0_16 = arith.constant 0 : index
    %c0_17 = arith.constant 0 : index
    %23 = vector.load %arg4[%c0_16, %c0_17] : memref<1x64xf32, #tpu.memory_space<vmem>>, vector<1x64xf32>
    %24 = vector.broadcast %23 : vector<1x64xf32> to vector<16x64xf32>
    %25 = arith.addf %22, %24 : vector<16x64xf32>
    %cst_18 = arith.constant 2.500000e-01 : f32
    %26 = vector.broadcast %cst_18 : f32 to vector<16x64xf32>
    %27 = arith.mulf %25, %26 : vector<16x64xf32>
    %28 = tpu.iota {dimensions = array<i32: 0>} : vector<16x16xi32>
    %29 = vector.broadcast %0 : i32 to vector<16x16xi32>
    %30 = arith.addi %29, %28 : vector<16x16xi32>
    %31 = tpu.iota {dimensions = array<i32: 1>} : vector<16x16xi32>
    %32 = vector.broadcast %4 : i32 to vector<16x16xi32>
    %33 = arith.addi %32, %31 : vector<16x16xi32>
    %34 = arith.subi %30, %33 : vector<16x16xi32>
    %35 = math.absi %34 : vector<16x16xi32>
    %c2_i32 = arith.constant 2 : i32
    %36 = vector.broadcast %c2_i32 : i32 to vector<16x16xi32>
    %37 = arith.cmpi sle, %35, %36 : vector<16x16xi32>
    %38 = vector.extract_strided_slice %27 {offsets = [0, 0], sizes = [16, 16], strides = [1, 1]} : vector<16x64xf32> to vector<16x16xf32>
    %39 = vector.extract_strided_slice %15 {offsets = [0, 0], sizes = [16, 16], strides = [1, 1]} : vector<16x64xf32> to vector<16x16xf32>
    %cst_19 = arith.constant dense<0.000000e+00> : vector<16x16xf32>
    %40 = tpu.matmul %38, %39, %cst_19 {dimension_numbers = #tpu.dot_dimension_numbers<[1], [1], [0], [0], [0, 0, 1, 0], [], []>} : vector<16x16xf32>, vector<16x16xf32>, vector<16x16xf32> -> vector<16x16xf32>
    %cst_20 = arith.constant -1.000000e+30 : f32
    %41 = vector.broadcast %cst_20 : f32 to vector<16x16xf32>
    %42 = arith.select %37, %40, %41 : vector<16x16xi1>, vector<16x16xf32>
    %cst_21 = arith.constant dense<0xFF800000> : vector<16xf32>
    %43 = vector.multi_reduction <maximumf>, %42, %cst_21 [1] : vector<16x16xf32> to vector<16xf32>
    %44 = vector.shape_cast %43 : vector<16xf32> to vector<16x1xf32>
    %45 = vector.broadcast %44 : vector<16x1xf32> to vector<16x16xf32>
    %46 = arith.subf %42, %45 : vector<16x16xf32>
    %47 = math.exp %46 : vector<16x16xf32>
    %cst_22 = arith.constant dense<0.000000e+00> : vector<16xf32>
    %48 = vector.multi_reduction <add>, %47, %cst_22 [1] : vector<16x16xf32> to vector<16xf32>
    %49 = vector.shape_cast %48 : vector<16xf32> to vector<16x1xf32>
    %50 = tpu.reciprocal %49 {approx = true} : vector<16x1xf32> -> vector<16x1xf32>
    %51 = vector.broadcast %50 : vector<16x1xf32> to vector<16x16xf32>
    %52 = arith.mulf %47, %51 : vector<16x16xf32>
    %53 = vector.extract_strided_slice %20 {offsets = [0, 0], sizes = [16, 16], strides = [1, 1]} : vector<16x64xf32> to vector<16x16xf32>
    %cst_23 = arith.constant dense<0.000000e+00> : vector<16x16xf32>
    %54 = tpu.matmul %52, %53, %cst_23 {dimension_numbers = #tpu.dot_dimension_numbers<[1], [0], [0], [1], [0, 0, 1, 1], [], []>} : vector<16x16xf32>, vector<16x16xf32>, vector<16x16xf32> -> vector<16x16xf32>
    %55 = vector.extract_strided_slice %27 {offsets = [0, 16], sizes = [16, 16], strides = [1, 1]} : vector<16x64xf32> to vector<16x16xf32>
    %56 = vector.extract_strided_slice %15 {offsets = [0, 16], sizes = [16, 16], strides = [1, 1]} : vector<16x64xf32> to vector<16x16xf32>
    %cst_24 = arith.constant dense<0.000000e+00> : vector<16x16xf32>
    %57 = tpu.matmul %55, %56, %cst_24 {dimension_numbers = #tpu.dot_dimension_numbers<[1], [1], [0], [0], [0, 0, 1, 0], [], []>} : vector<16x16xf32>, vector<16x16xf32>, vector<16x16xf32> -> vector<16x16xf32>
    %cst_25 = arith.constant -1.000000e+30 : f32
    %58 = vector.broadcast %cst_25 : f32 to vector<16x16xf32>
    %59 = arith.select %37, %57, %58 : vector<16x16xi1>, vector<16x16xf32>
    %cst_26 = arith.constant dense<0xFF800000> : vector<16xf32>
    %60 = vector.multi_reduction <maximumf>, %59, %cst_26 [1] : vector<16x16xf32> to vector<16xf32>
    %61 = vector.shape_cast %60 : vector<16xf32> to vector<16x1xf32>
    %62 = vector.broadcast %61 : vector<16x1xf32> to vector<16x16xf32>
    %63 = arith.subf %59, %62 : vector<16x16xf32>
    %64 = math.exp %63 : vector<16x16xf32>
    %cst_27 = arith.constant dense<0.000000e+00> : vector<16xf32>
    %65 = vector.multi_reduction <add>, %64, %cst_27 [1] : vector<16x16xf32> to vector<16xf32>
    %66 = vector.shape_cast %65 : vector<16xf32> to vector<16x1xf32>
    %67 = tpu.reciprocal %66 {approx = true} : vector<16x1xf32> -> vector<16x1xf32>
    %68 = vector.broadcast %67 : vector<16x1xf32> to vector<16x16xf32>
    %69 = arith.mulf %64, %68 : vector<16x16xf32>
    %70 = vector.extract_strided_slice %20 {offsets = [0, 16], sizes = [16, 16], strides = [1, 1]} : vector<16x64xf32> to vector<16x16xf32>
    %cst_28 = arith.constant dense<0.000000e+00> : vector<16x16xf32>
    %71 = tpu.matmul %69, %70, %cst_28 {dimension_numbers = #tpu.dot_dimension_numbers<[1], [0], [0], [1], [0, 0, 1, 1], [], []>} : vector<16x16xf32>, vector<16x16xf32>, vector<16x16xf32> -> vector<16x16xf32>
    %72 = vector.extract_strided_slice %27 {offsets = [0, 32], sizes = [16, 16], strides = [1, 1]} : vector<16x64xf32> to vector<16x16xf32>
    %73 = vector.extract_strided_slice %15 {offsets = [0, 32], sizes = [16, 16], strides = [1, 1]} : vector<16x64xf32> to vector<16x16xf32>
    %cst_29 = arith.constant dense<0.000000e+00> : vector<16x16xf32>
    %74 = tpu.matmul %72, %73, %cst_29 {dimension_numbers = #tpu.dot_dimension_numbers<[1], [1], [0], [0], [0, 0, 1, 0], [], []>} : vector<16x16xf32>, vector<16x16xf32>, vector<16x16xf32> -> vector<16x16xf32>
    %cst_30 = arith.constant -1.000000e+30 : f32
    %75 = vector.broadcast %cst_30 : f32 to vector<16x16xf32>
    %76 = arith.select %37, %74, %75 : vector<16x16xi1>, vector<16x16xf32>
    %cst_31 = arith.constant dense<0xFF800000> : vector<16xf32>
    %77 = vector.multi_reduction <maximumf>, %76, %cst_31 [1] : vector<16x16xf32> to vector<16xf32>
    %78 = vector.shape_cast %77 : vector<16xf32> to vector<16x1xf32>
    %79 = vector.broadcast %78 : vector<16x1xf32> to vector<16x16xf32>
    %80 = arith.subf %76, %79 : vector<16x16xf32>
    %81 = math.exp %80 : vector<16x16xf32>
    %cst_32 = arith.constant dense<0.000000e+00> : vector<16xf32>
    %82 = vector.multi_reduction <add>, %81, %cst_32 [1] : vector<16x16xf32> to vector<16xf32>
    %83 = vector.shape_cast %82 : vector<16xf32> to vector<16x1xf32>
    %84 = tpu.reciprocal %83 {approx = true} : vector<16x1xf32> -> vector<16x1xf32>
    %85 = vector.broadcast %84 : vector<16x1xf32> to vector<16x16xf32>
    %86 = arith.mulf %81, %85 : vector<16x16xf32>
    %87 = vector.extract_strided_slice %20 {offsets = [0, 32], sizes = [16, 16], strides = [1, 1]} : vector<16x64xf32> to vector<16x16xf32>
    %cst_33 = arith.constant dense<0.000000e+00> : vector<16x16xf32>
    %88 = tpu.matmul %86, %87, %cst_33 {dimension_numbers = #tpu.dot_dimension_numbers<[1], [0], [0], [1], [0, 0, 1, 1], [], []>} : vector<16x16xf32>, vector<16x16xf32>, vector<16x16xf32> -> vector<16x16xf32>
    %89 = vector.extract_strided_slice %27 {offsets = [0, 48], sizes = [16, 16], strides = [1, 1]} : vector<16x64xf32> to vector<16x16xf32>
    %90 = vector.extract_strided_slice %15 {offsets = [0, 48], sizes = [16, 16], strides = [1, 1]} : vector<16x64xf32> to vector<16x16xf32>
    %cst_34 = arith.constant dense<0.000000e+00> : vector<16x16xf32>
    %91 = tpu.matmul %89, %90, %cst_34 {dimension_numbers = #tpu.dot_dimension_numbers<[1], [1], [0], [0], [0, 0, 1, 0], [], []>} : vector<16x16xf32>, vector<16x16xf32>, vector<16x16xf32> -> vector<16x16xf32>
    %cst_35 = arith.constant -1.000000e+30 : f32
    %92 = vector.broadcast %cst_35 : f32 to vector<16x16xf32>
    %93 = arith.select %37, %91, %92 : vector<16x16xi1>, vector<16x16xf32>
    %cst_36 = arith.constant dense<0xFF800000> : vector<16xf32>
    %94 = vector.multi_reduction <maximumf>, %93, %cst_36 [1] : vector<16x16xf32> to vector<16xf32>
    %95 = vector.shape_cast %94 : vector<16xf32> to vector<16x1xf32>
    %96 = vector.broadcast %95 : vector<16x1xf32> to vector<16x16xf32>
    %97 = arith.subf %93, %96 : vector<16x16xf32>
    %98 = math.exp %97 : vector<16x16xf32>
    %cst_37 = arith.constant dense<0.000000e+00> : vector<16xf32>
    %99 = vector.multi_reduction <add>, %98, %cst_37 [1] : vector<16x16xf32> to vector<16xf32>
    %100 = vector.shape_cast %99 : vector<16xf32> to vector<16x1xf32>
    %101 = tpu.reciprocal %100 {approx = true} : vector<16x1xf32> -> vector<16x1xf32>
    %102 = vector.broadcast %101 : vector<16x1xf32> to vector<16x16xf32>
    %103 = arith.mulf %98, %102 : vector<16x16xf32>
    %104 = vector.extract_strided_slice %20 {offsets = [0, 48], sizes = [16, 16], strides = [1, 1]} : vector<16x64xf32> to vector<16x16xf32>
    %cst_38 = arith.constant dense<0.000000e+00> : vector<16x16xf32>
    %105 = tpu.matmul %103, %104, %cst_38 {dimension_numbers = #tpu.dot_dimension_numbers<[1], [0], [0], [1], [0, 0, 1, 1], [], []>} : vector<16x16xf32>, vector<16x16xf32>, vector<16x16xf32> -> vector<16x16xf32>
    %106 = tpu.concatenate %54, %71, %88, %105 in 1 : vector<16x16xf32>, vector<16x16xf32>, vector<16x16xf32>, vector<16x16xf32> -> vector<16x64xf32>
    %c0_39 = arith.constant 0 : index
    %c0_40 = arith.constant 0 : index
    %107 = vector.load %arg9[%c0_39, %c0_40] : memref<64x64xf32, #tpu.memory_space<vmem>>, vector<64x64xf32>
    %cst_41 = arith.constant dense<0.000000e+00> : vector<16x64xf32>
    %108 = tpu.matmul %106, %107, %cst_41 {dimension_numbers = #tpu.dot_dimension_numbers<[1], [0], [0], [1], [0, 0, 1, 1], [], []>} : vector<16x64xf32>, vector<64x64xf32>, vector<16x64xf32> -> vector<16x64xf32>
    %c0_42 = arith.constant 0 : index
    %c0_43 = arith.constant 0 : index
    %109 = vector.load %arg10[%c0_42, %c0_43] : memref<1x64xf32, #tpu.memory_space<vmem>>, vector<1x64xf32>
    %110 = vector.broadcast %109 : vector<1x64xf32> to vector<16x64xf32>
    %111 = arith.addf %108, %110 : vector<16x64xf32>
    %c0_44 = arith.constant 0 : index
    %c0_45 = arith.constant 0 : index
    %c0_46 = arith.constant 0 : index
    %112 = vector.load %arg11[%c0_44, %c0_45, %c0_46] : memref<1x16x64xf32, #tpu.memory_space<vmem>>, vector<1x16x64xf32>
    %113 = vector.shape_cast %112 : vector<1x16x64xf32> to vector<16x64xf32>
    %114 = vector.shape_cast %111 : vector<16x64xf32> to vector<1x16x64xf32>
    tpu.vector_store %arg11[%c0_44, %c0_45, %c0_46], %114 {strides = array<i32>} : memref<1x16x64xf32, #tpu.memory_space<vmem>>, vector<1x16x64xf32>,
    return
  }
  func.func @transform_0(%arg0: i32, %arg1: i32) -> (i32, i32, i32) {
    %c0_i32 = arith.constant 0 : i32
    %c0_i32_0 = arith.constant 0 : i32
    %c0_i32_1 = arith.constant 0 : i32
    return %arg0, %c0_i32, %c0_i32_0 : i32, i32, i32
  }
  func.func @transform_1(%arg0: i32, %arg1: i32) -> (i32, i32) {
    %c0_i32 = arith.constant 0 : i32
    %c0_i32_0 = arith.constant 0 : i32
    %c0_i32_1 = arith.constant 0 : i32
    return %c0_i32, %c0_i32_0 : i32, i32
  }
  func.func @transform_2(%arg0: i32, %arg1: i32) -> (i32, i32) {
    %c0_i32 = arith.constant 0 : i32
    %c0_i32_0 = arith.constant 0 : i32
    %c0_i32_1 = arith.constant 0 : i32
    return %c0_i32, %c0_i32_0 : i32, i32
  }
  func.func @transform_3(%arg0: i32, %arg1: i32) -> (i32, i32) {
    %c0_i32 = arith.constant 0 : i32
    %c0_i32_0 = arith.constant 0 : i32
    %c0_i32_1 = arith.constant 0 : i32
    return %c0_i32, %c0_i32_0 : i32, i32
  }
  func.func @transform_4(%arg0: i32, %arg1: i32) -> (i32, i32) {
    %c0_i32 = arith.constant 0 : i32
    %c0_i32_0 = arith.constant 0 : i32
    %c0_i32_1 = arith.constant 0 : i32
    return %c0_i32, %c0_i32_0 : i32, i32
  }
  func.func @transform_5(%arg0: i32, %arg1: i32) -> (i32, i32) {
    %c0_i32 = arith.constant 0 : i32
    %c0_i32_0 = arith.constant 0 : i32
    %c0_i32_1 = arith.constant 0 : i32
    return %c0_i32, %c0_i32_0 : i32, i32
  }
  func.func @transform_6(%arg0: i32, %arg1: i32) -> (i32, i32) {
    %c0_i32 = arith.constant 0 : i32
    %c0_i32_0 = arith.constant 0 : i32
    %c0_i32_1 = arith.constant 0 : i32
    return %c0_i32, %c0_i32_0 : i32, i32
  }
  func.func @transform_7(%arg0: i32, %arg1: i32) -> (i32, i32) {
    %c0_i32 = arith.constant 0 : i32
    %c0_i32_0 = arith.constant 0 : i32
    %c0_i32_1 = arith.constant 0 : i32
    return %c0_i32, %c0_i32_0 : i32, i32
  }
  func.func @transform_8(%arg0: i32, %arg1: i32) -> (i32, i32) {
    %c0_i32 = arith.constant 0 : i32
    %c0_i32_0 = arith.constant 0 : i32
    %c0_i32_1 = arith.constant 0 : i32
    return %c0_i32, %c0_i32_0 : i32, i32
  }
  func.func @transform_9(%arg0: i32, %arg1: i32) -> (i32, i32, i32) {
    %c0_i32 = arith.constant 0 : i32
    %c0_i32_0 = arith.constant 0 : i32
    return %arg0, %arg1, %c0_i32 : i32, i32, i32
  }
}

</mosaic_0001>

<llo_original>
// kernel: tpu_custom_call.1
$region0: #{tpu_custom_call.1}
  #allocation0 [shape = 'u32[]', space=smem, size = 0x4, offset = 0x4, fixed_abs, tag = 'smem constant byte address 0x4 - core index']
  #allocation1 [shape = 'u32[144,128]{1,0:T(1,128)}', space=vmem, size = 0x12000, scoped, tag = 'internal scratch']
  %s0 = inlined_call_operand.hbm [shape: f32[2,16,64], index: 0, kind: input, shape index: {}]
  %s1 = inlined_call_operand.hbm [shape: f32[64,64], index: 1, kind: input, shape index: {}]
  %s2 = inlined_call_operand.vmem [shape: f32[1,64], index: 2, kind: input, shape index: {}]
  %s3 = inlined_call_operand.hbm [shape: f32[64,64], index: 3, kind: input, shape index: {}]
  %s4 = inlined_call_operand.vmem [shape: f32[1,64], index: 4, kind: input, shape index: {}]
  %s5 = inlined_call_operand.hbm [shape: f32[64,64], index: 5, kind: input, shape index: {}]
  %s6 = inlined_call_operand.vmem [shape: f32[1,64], index: 6, kind: input, shape index: {}]
  %s7 = inlined_call_operand.hbm [shape: f32[64,64], index: 7, kind: input, shape index: {}]
  %s8 = inlined_call_operand.vmem [shape: f32[1,64], index: 8, kind: input, shape index: {}]
  %s9 = inlined_call_operand.hbm [shape: f32[2,16,64], index: 9, kind: output, shape index: {}]
  %s10 = sld [smem:[#allocation0]]
  $region89: #{tpu_custom_call.1} parent=0
    _
  %s12 = ssub.s32 1, %s10
  %s13 = scalar_select 0, %s12, %s10
  $region1: #{tpu_custom_call.1} parent=0
    #allocation2 [shape = 'u8[16384]{0}', space=vmem, size = 0x4000, scoped, tag = 'input window, operand 0']
    #allocation3 [shape = 's32[2]{0}', space=sflag, size = 0x8, scoped, tag = 'scoped memory for tpu_custom_call.1']
    #allocation4 [shape = 's32[2]{0}', space=sflag, size = 0x8, scoped, tag = 'scoped memory for tpu_custom_call.1']
    #allocation5 [shape = 'u8[32768]{0}', space=vmem, size = 0x8000, scoped, tag = 'input window, operand 1, single buffered']
    #allocation6 [shape = 's32[1]{0}', space=sflag, size = 0x4, scoped, tag = 'scoped memory for tpu_custom_call.1']
    #allocation7 [shape = 'u8[32768]{0}', space=vmem, size = 0x8000, scoped, tag = 'input window, operand 3, single buffered']
    #allocation8 [shape = 'u8[32768]{0}', space=vmem, size = 0x8000, scoped, tag = 'input window, operand 5, single buffered']
    #allocation9 [shape = 's32[1]{0}', space=sflag, size = 0x4, scoped, tag = 'scoped memory for tpu_custom_call.1']
    #allocation10 [shape = 'u8[32768]{0}', space=vmem, size = 0x8000, scoped, tag = 'input window, operand 7, single buffered']
    #allocation11 [shape = 'u8[16384]{0}', space=vmem, size = 0x4000, scoped, tag = 'output window, operand 0']
    %14 = vsyncpa [#allocation3], 0
    %s15 = scalar_lea.sflag [#allocation3], 1
    %16 = vsyncpa %s15, 0
    %17 = vsyncpa [#allocation6], 0
    %18 = vsyncpa [#allocation9], 0
    %19 = vsyncpa [#allocation4], 0
    %s20 = scalar_lea.sflag [#allocation4], 1
    %21 = vsyncpa %s20, 0
    loop: start=0, step=1, limit=4
    $region2: #{tpu_custom_call.1} parent=1 // loop_pre_header
      _
    $region3: #{tpu_custom_call.1} parent=1 // loop_header
      %s23 = sphi 0, %s27
      %p24 = scmp.ge.s32.totalorder %s23, 4
      %s30 = sphi 0, %s42
      %s31 = sphi 0, %s38
      %s32 = sphi 0, %s30
      %s33 = sphi 0, %s31
      %s34 = sphi 0, %s32
      %s35 = sphi 0, %s33
      %s45 = sphi 0, %s47
      %s48 = sphi 0, %s45
      %s49 = sphi 0, %s48
      %s65 = sphi 0, %s49
      %s69 = sphi 0, %s69
      %s71 = sphi 0, %s69
      %s72 = sphi 0, %s71
      %s86 = sphi 0, %s72
      %s90 = sphi 0, %s90
      %s92 = sphi 0, %s90
      %s93 = sphi 0, %s92
      %s107 = sphi 0, %s93
      %s111 = sphi 0, %s111
      %s113 = sphi 0, %s111
      %s114 = sphi 0, %s113
      %s128 = sphi 0, %s114
      %s132 = sphi 0, %s132
      %s134 = sphi 0, %s132
      %s135 = sphi 0, %s134
      %s149 = sphi 0, %s135
      %s153 = sphi 0, %s153
      %s155 = sphi 0, %s153
      %s156 = sphi 0, %s155
      %s170 = sphi 0, %s156
      %s174 = sphi 0, %s174
      %s176 = sphi 0, %s174
      %s177 = sphi 0, %s176
      %s191 = sphi 0, %s177
      %s195 = sphi 0, %s195
      %s197 = sphi 0, %s195
      %s198 = sphi 0, %s197
      %s212 = sphi 0, %s198
      %s216 = sphi 0, %s216
      %s218 = sphi 0, %s216
      %s219 = sphi 0, %s218
      %s233 = sphi 0, %s219
      %s241 = sphi 0, %s243
      %s244 = sphi 0, %s241
      %s245 = sphi 0, %s244
      %s261 = sphi 0, %s245
    $region4: #{tpu_custom_call.1} parent=1 // loop_header_branch
      %26 = sbr.rel (%p24) target = $region8
    $region5: #{tpu_custom_call.1} parent=1 // loop_body
      %s28 = ssub.s32 %s23, 1
      %s29 = ssub.s32 %s23, 2
      %s36 = sadd.s32 1, %s31
      %p37 = scmp.ge.s32.totalorder %s36, 1
      %s38 = scalar_select %p37, 0, %s36
      %s39 = sadd.s32 1, %s30
      %s40 = scalar_select %p37, %s39, %s30
      %p41 = scmp.ge.s32.totalorder %s40, 2
      %s42 = scalar_select %p41, 0, %s40
      %s43 = ssub.s32 %s30, %s42
      %p44 = scmp.eq.s32.totalorder %s43, 0
      %s46 = sadd.s32 %s45, 1
      %s47 = scalar_select %p44, %s45, %s46
      %p50 = pneg %p44
      %p51 = scmp.eq.s32.totalorder %s23, 1
      %p52 = por %p50, %p51
      %p53 = scmp.ne.s32.totalorder %s45, %s48
      %p54 = scmp.eq.s32.totalorder %s23, 0
      %p55 = por %p53, %p54
      %p56 = scmp.ne.s32.totalorder %s45, %s48
      %p57 = scmp.eq.s32.totalorder %s28, 1
      %p58 = por %p56, %p57
      %p59 = scmp.ne.s32.totalorder %s48, %s49
      %p60 = scmp.eq.s32.totalorder %s28, 0
      %p61 = por %p59, %p60
      %p62 = scmp.ne.s32.totalorder %s48, %s49
      %p63 = scmp.eq.s32.totalorder %s29, 1
      %p64 = por %p62, %p63
      %p66 = scmp.ne.s32.totalorder %s49, %s65
      %p67 = scmp.eq.s32.totalorder %s29, 0
      %p68 = por %p66, %p67
      %s70 = sadd.s32 %s69, 1
      %p73 = scmp.eq.s32.totalorder %s23, 1
      %p74 = scmp.ne.s32.totalorder %s69, %s71
      %p75 = scmp.eq.s32.totalorder %s23, 0
      %p76 = por %p74, %p75
      %p77 = scmp.ne.s32.totalorder %s69, %s71
      %p78 = scmp.eq.s32.totalorder %s28, 1
      %p79 = por %p77, %p78
      %p80 = scmp.ne.s32.totalorder %s71, %s72
      %p81 = scmp.eq.s32.totalorder %s28, 0
      %p82 = por %p80, %p81
      %p83 = scmp.ne.s32.totalorder %s71, %s72
      %p84 = scmp.eq.s32.totalorder %s29, 1
      %p85 = por %p83, %p84
      %p87 = scmp.ne.s32.totalorder %s72, %s86
      %p88 = scmp.eq.s32.totalorder %s29, 0
      %p89 = por %p87, %p88
      %s91 = sadd.s32 %s90, 1
      %p94 = scmp.eq.s32.totalorder %s23, 1
      %p95 = scmp.ne.s32.totalorder %s90, %s92
      %p96 = scmp.eq.s32.totalorder %s23, 0
      %p97 = por %p95, %p96
      %p98 = scmp.ne.s32.totalorder %s90, %s92
      %p99 = scmp.eq.s32.totalorder %s28, 1
      %p100 = por %p98, %p99
      %p101 = scmp.ne.s32.totalorder %s92, %s93
      %p102 = scmp.eq.s32.totalorder %s28, 0
      %p103 = por %p101, %p102
      %p104 = scmp.ne.s32.totalorder %s92, %s93
      %p105 = scmp.eq.s32.totalorder %s29, 1
      %p106 = por %p104, %p105
      %p108 = scmp.ne.s32.totalorder %s93, %s107
      %p109 = scmp.eq.s32.totalorder %s29, 0
      %p110 = por %p108, %p109
      %s112 = sadd.s32 %s111, 1
      %p115 = scmp.eq.s32.totalorder %s23, 1
      %p116 = scmp.ne.s32.totalorder %s111, %s113
      %p117 = scmp.eq.s32.totalorder %s23, 0
      %p118 = por %p116, %p117
      %p119 = scmp.ne.s32.totalorder %s111, %s113
      %p120 = scmp.eq.s32.totalorder %s28, 1
      %p121 = por %p119, %p120
      %p122 = scmp.ne.s32.totalorder %s113, %s114
      %p123 = scmp.eq.s32.totalorder %s28, 0
      %p124 = por %p122, %p123
      %p125 = scmp.ne.s32.totalorder %s113, %s114
      %p126 = scmp.eq.s32.totalorder %s29, 1
      %p127 = por %p125, %p126
      %p129 = scmp.ne.s32.totalorder %s114, %s128
      %p130 = scmp.eq.s32.totalorder %s29, 0
      %p131 = por %p129, %p130
      %s133 = sadd.s32 %s132, 1
      %p136 = scmp.eq.s32.totalorder %s23, 1
      %p137 = scmp.ne.s32.totalorder %s132, %s134
      %p138 = scmp.eq.s32.totalorder %s23, 0
      %p139 = por %p137, %p138
      %p140 = scmp.ne.s32.totalorder %s132, %s134
      %p141 = scmp.eq.s32.totalorder %s28, 1
      %p142 = por %p140, %p141
      %p143 = scmp.ne.s32.totalorder %s134, %s135
      %p144 = scmp.eq.s32.totalorder %s28, 0
      %p145 = por %p143, %p144
      %p146 = scmp.ne.s32.totalorder %s134, %s135
      %p147 = scmp.eq.s32.totalorder %s29, 1
      %p148 = por %p146, %p147
      %p150 = scmp.ne.s32.totalorder %s135, %s149
      %p151 = scmp.eq.s32.totalorder %s29, 0
      %p152 = por %p150, %p151
      %s154 = sadd.s32 %s153, 1
      %p157 = scmp.eq.s32.totalorder %s23, 1
      %p158 = scmp.ne.s32.totalorder %s153, %s155
      %p159 = scmp.eq.s32.totalorder %s23, 0
      %p160 = por %p158, %p159
      %p161 = scmp.ne.s32.totalorder %s153, %s155
      %p162 = scmp.eq.s32.totalorder %s28, 1
      %p163 = por %p161, %p162
      %p164 = scmp.ne.s32.totalorder %s155, %s156
      %p165 = scmp.eq.s32.totalorder %s28, 0
      %p166 = por %p164, %p165
      %p167 = scmp.ne.s32.totalorder %s155, %s156
      %p168 = scmp.eq.s32.totalorder %s29, 1
      %p169 = por %p167, %p168
      %p171 = scmp.ne.s32.totalorder %s156, %s170
      %p172 = scmp.eq.s32.totalorder %s29, 0
      %p173 = por %p171, %p172
      %s175 = sadd.s32 %s174, 1
      %p178 = scmp.eq.s32.totalorder %s23, 1
      %p179 = scmp.ne.s32.totalorder %s174, %s176
      %p180 = scmp.eq.s32.totalorder %s23, 0
      %p181 = por %p179, %p180
      %p182 = scmp.ne.s32.totalorder %s174, %s176
      %p183 = scmp.eq.s32.totalorder %s28, 1
      %p184 = por %p182, %p183
      %p185 = scmp.ne.s32.totalorder %s176, %s177
      %p186 = scmp.eq.s32.totalorder %s28, 0
      %p187 = por %p185, %p186
      %p188 = scmp.ne.s32.totalorder %s176, %s177
      %p189 = scmp.eq.s32.totalorder %s29, 1
      %p190 = por %p188, %p189
      %p192 = scmp.ne.s32.totalorder %s177, %s191
      %p193 = scmp.eq.s32.totalorder %s29, 0
      %p194 = por %p192, %p193
      %s196 = sadd.s32 %s195, 1
      %p199 = scmp.eq.s32.totalorder %s23, 1
      %p200 = scmp.ne.s32.totalorder %s195, %s197
      %p201 = scmp.eq.s32.totalorder %s23, 0
      %p202 = por %p200, %p201
      %p203 = scmp.ne.s32.totalorder %s195, %s197
      %p204 = scmp.eq.s32.totalorder %s28, 1
      %p205 = por %p203, %p204
      %p206 = scmp.ne.s32.totalorder %s197, %s198
      %p207 = scmp.eq.s32.totalorder %s28, 0
      %p208 = por %p206, %p207
      %p209 = scmp.ne.s32.totalorder %s197, %s198
      %p210 = scmp.eq.s32.totalorder %s29, 1
      %p211 = por %p209, %p210
      %p213 = scmp.ne.s32.totalorder %s198, %s212
      %p214 = scmp.eq.s32.totalorder %s29, 0
      %p215 = por %p213, %p214
      %s217 = sadd.s32 %s216, 1
      %p220 = scmp.eq.s32.totalorder %s23, 1
      %p221 = scmp.ne.s32.totalorder %s216, %s218
      %p222 = scmp.eq.s32.totalorder %s23, 0
      %p223 = por %p221, %p222
      %p224 = scmp.ne.s32.totalorder %s216, %s218
      %p225 = scmp.eq.s32.totalorder %s28, 1
      %p226 = por %p224, %p225
      %p227 = scmp.ne.s32.totalorder %s218, %s219
      %p228 = scmp.eq.s32.totalorder %s28, 0
      %p229 = por %p227, %p228
      %p230 = scmp.ne.s32.totalorder %s218, %s219
      %p231 = scmp.eq.s32.totalorder %s29, 1
      %p232 = por %p230, %p231
      %p234 = scmp.ne.s32.totalorder %s219, %s233
      %p235 = scmp.eq.s32.totalorder %s29, 0
      %p236 = por %p234, %p235
      %s237 = ssub.s32 %s30, %s42
      %s238 = ssub.s32 %s31, %s38
      %s239 = sor.u32 %s237, %s238
      %p240 = scmp.eq.s32.totalorder %s239, 0
      %s242 = sadd.s32 %s241, 1
      %s243 = scalar_select %p240, %s241, %s242
      %p246 = pneg %p240
      %p247 = scmp.eq.s32.totalorder %s23, 1
      %p248 = por %p246, %p247
      %p249 = scmp.ne.s32.totalorder %s241, %s244
      %p250 = scmp.eq.s32.totalorder %s23, 0
      %p251 = por %p249, %p250
      %p252 = scmp.ne.s32.totalorder %s241, %s244
      %p253 = scmp.eq.s32.totalorder %s28, 1
      %p254 = por %p252, %p253
      %p255 = scmp.ne.s32.totalorder %s244, %s245
      %p256 = scmp.eq.s32.totalorder %s28, 0
      %p257 = por %p255, %p256
      %p258 = scmp.ne.s32.totalorder %s244, %s245
      %p259 = scmp.eq.s32.totalorder %s29, 1
      %p260 = por %p258, %p259
      %p262 = scmp.ne.s32.totalorder %s245, %s261
      %p263 = scmp.eq.s32.totalorder %s29, 0
      %p264 = por %p262, %p263
      %p265 = scmp.le.s32.totalorder 1, %s23
      %p266 = scmp.lt.s32.totalorder %s23, 3
      %p267 = pnand %p265, %p266
      %p268 = pneg %p267
      // Predicated region
      $region9: #{tpu_custom_call.1} parent=5 // pred_check
        _
      $region10: #{tpu_custom_call.1} parent=5 // pred_check_branch
        %270 = sbr.rel (%p267) target = $region12
      $region11: #{tpu_custom_call.1} parent=5 // pred_region
        %s271 = ssub.s32 %s23, 1
        // Predicated region
        $region13: #{tpu_custom_call.1} parent=11 // pred_check
          %p272 = pneg %p82
        $region14: #{tpu_custom_call.1} parent=11 // pred_check_branch
          %274 = sbr.rel (%p272) target = $region16
        $region15: #{tpu_custom_call.1} parent=11 // pred_region
          %s276 = ssub.s32 1024, 1024
          %277 = vsyncadd [#allocation6], %s276
          %s278 = sshll.u32 [#allocation5], 4
          %s279 = int_to_ptr.vmem [resolvable:$true] %s278
          %284 = dma.hbm_to_vmem [thread:$0]  %s1, 1024, %s279, [#allocation6], 128, 128, 8
        $region16: #{tpu_custom_call.1} parent=11 // pred_fallthru
          _
        // Predicated region
        $region17: #{tpu_custom_call.1} parent=11 // pred_check
          %p285 = pneg %p103
        $region18: #{tpu_custom_call.1} parent=11 // pred_check_branch
          %287 = sbr.rel (%p285) target = $region20
        $region19: #{tpu_custom_call.1} parent=11 // pred_region
          _
        $region20: #{tpu_custom_call.1} parent=11 // pred_fallthru
          _
        // Predicated region
        $region21: #{tpu_custom_call.1} parent=11 // pred_check
          %p288 = pneg %p124
        $region22: #{tpu_custom_call.1} parent=11 // pred_check_branch
          %290 = sbr.rel (%p288) target = $region24
        $region23: #{tpu_custom_call.1} parent=11 // pred_region
          %s292 = ssub.s32 1024, 1024
          %293 = vsyncadd [#allocation6], %s292
          %s294 = sshll.u32 [#allocation7], 4
          %s295 = int_to_ptr.vmem [resolvable:$true] %s294
          %300 = dma.hbm_to_vmem [thread:$0]  %s3, 1024, %s295, [#allocation6], 128, 128, 8
        $region24: #{tpu_custom_call.1} parent=11 // pred_fallthru
          _
        // Predicated region
        $region25: #{tpu_custom_call.1} parent=11 // pred_check
          %p301 = pneg %p145
        $region26: #{tpu_custom_call.1} parent=11 // pred_check_branch
          %303 = sbr.rel (%p301) target = $region28
        $region27: #{tpu_custom_call.1} parent=11 // pred_region
          _
        $region28: #{tpu_custom_call.1} parent=11 // pred_fallthru
          _
        // Predicated region
        $region29: #{tpu_custom_call.1} parent=11 // pred_check
          %p304 = pneg %p166
        $region30: #{tpu_custom_call.1} parent=11 // pred_check_branch
          %306 = sbr.rel (%p304) target = $region32
        $region31: #{tpu_custom_call.1} parent=11 // pred_region
          %s308 = ssub.s32 1024, 1024
          %309 = vsyncadd [#allocation9], %s308
          %s310 = sshll.u32 [#allocation8], 4
          %s311 = int_to_ptr.vmem [resolvable:$true] %s310
          %316 = dma.hbm_to_vmem [thread:$0]  %s5, 1024, %s311, [#allocation9], 128, 128, 8
        $region32: #{tpu_custom_call.1} parent=11 // pred_fallthru
          _
        // Predicated region
        $region33: #{tpu_custom_call.1} parent=11 // pred_check
          %p317 = pneg %p187
        $region34: #{tpu_custom_call.1} parent=11 // pred_check_branch
          %319 = sbr.rel (%p317) target = $region36
        $region35: #{tpu_custom_call.1} parent=11 // pred_region
          _
        $region36: #{tpu_custom_call.1} parent=11 // pred_fallthru
          _
        // Predicated region
        $region37: #{tpu_custom_call.1} parent=11 // pred_check
          %p320 = pneg %p208
        $region38: #{tpu_custom_call.1} parent=11 // pred_check_branch
          %322 = sbr.rel (%p320) target = $region40
        $region39: #{tpu_custom_call.1} parent=11 // pred_region
          %s324 = ssub.s32 1024, 1024
          %325 = vsyncadd [#allocation9], %s324
          %s326 = sshll.u32 [#allocation10], 4
          %s327 = int_to_ptr.vmem [resolvable:$true] %s326
          %332 = dma.hbm_to_vmem [thread:$0]  %s7, 1024, %s327, [#allocation9], 128, 128, 8
        $region40: #{tpu_custom_call.1} parent=11 // pred_fallthru
          _
        // Predicated region
        $region41: #{tpu_custom_call.1} parent=11 // pred_check
          %p333 = pneg %p229
        $region42: #{tpu_custom_call.1} parent=11 // pred_check_branch
          %335 = sbr.rel (%p333) target = $region44
        $region43: #{tpu_custom_call.1} parent=11 // pred_region
          _
        $region44: #{tpu_custom_call.1} parent=11 // pred_fallthru
          _
      $region12: #{tpu_custom_call.1} parent=5 // pred_fallthru
        _
      %p336 = scmp.lt.s32.totalorder %s23, 2
      // Predicated region
      $region45: #{tpu_custom_call.1} parent=5 // pred_check
        %p337 = pneg %p336
      $region46: #{tpu_custom_call.1} parent=5 // pred_check_branch
        %339 = sbr.rel (%p337) target = $region48
      $region47: #{tpu_custom_call.1} parent=5 // pred_region
        // Predicated region
        $region49: #{tpu_custom_call.1} parent=47 // pred_check
          %p340 = pneg %p55
        $region50: #{tpu_custom_call.1} parent=47 // pred_check_branch
          %342 = sbr.rel (%p340) target = $region52
        $region51: #{tpu_custom_call.1} parent=47 // pred_region
          %s343 = sand.u32 %s45, 1
          %s344 = scalar_lea.sflag [#allocation3], %s343
          %s345 = sand.u32 %s45, 1
          %s346 = smul.addr %s345, 16
          %s347 = scalar_lea.vmem [#allocation2], %s346
          %s349 = ssub.s32 256, 256
          %350 = vsyncadd %s344, %s349
          %s351 = smul.addr %s30, 2
          %s352 = smul.addr %s351, 128
          %s353 = scalar_lea.hbm %s0, %s352
          %s354 = sshll.u32 %s347, 4
          %s355 = int_to_ptr.vmem [resolvable:$true] %s354
          %360 = dma.hbm_to_vmem [thread:$0]  %s353, 256, %s355, %s344, 128, 128, 8
        $region52: #{tpu_custom_call.1} parent=47 // pred_fallthru
          _
      $region48: #{tpu_custom_call.1} parent=5 // pred_fallthru
        _
      %p361 = scmp.le.s32.totalorder 1, %s23
      %p362 = scmp.lt.s32.totalorder %s23, 3
      %p363 = pnand %p361, %p362
      %p364 = pneg %p363
      // Predicated region
      $region53: #{tpu_custom_call.1} parent=5 // pred_check
        _
      $region54: #{tpu_custom_call.1} parent=5 // pred_check_branch
        %366 = sbr.rel (%p363) target = $region56
      $region55: #{tpu_custom_call.1} parent=5 // pred_region
        %s367 = ssub.s32 %s23, 1
        %s368 = sand.u32 %s48, 1
        %s369 = scalar_lea.sflag [#allocation3], %s368
        %s370 = sand.u32 %s48, 1
        %s371 = smul.addr %s370, 16
        %s372 = scalar_lea.vmem [#allocation2], %s371
        // Predicated region
        $region57: #{tpu_custom_call.1} parent=55 // pred_check
          %p373 = pneg %p61
        $region58: #{tpu_custom_call.1} parent=55 // pred_check_branch
          %375 = sbr.rel (%p373) target = $region60
        $region59: #{tpu_custom_call.1} parent=55 // pred_region
          %376 = dma.done %s369, 256
        $region60: #{tpu_custom_call.1} parent=55 // pred_fallthru
          _
        // Predicated region
        $region61: #{tpu_custom_call.1} parent=55 // pred_check
          %p377 = pneg %p82
        $region62: #{tpu_custom_call.1} parent=55 // pred_check_branch
          %379 = sbr.rel (%p377) target = $region64
        $region63: #{tpu_custom_call.1} parent=55 // pred_region
          %380 = dma.done [#allocation6], 1024
        $region64: #{tpu_custom_call.1} parent=55 // pred_fallthru
          _
        // Predicated region
        $region65: #{tpu_custom_call.1} parent=55 // pred_check
          %p381 = pneg %p124
        $region66: #{tpu_custom_call.1} parent=55 // pred_check_branch
          %383 = sbr.rel (%p381) target = $region68
        $region67: #{tpu_custom_call.1} parent=55 // pred_region
          %384 = dma.done [#allocation6], 1024
        $region68: #{tpu_custom_call.1} parent=55 // pred_fallthru
          _
        // Predicated region
        $region69: #{tpu_custom_call.1} parent=55 // pred_check
          %p385 = pneg %p166
        $region70: #{tpu_custom_call.1} parent=55 // pred_check_branch
          %387 = sbr.rel (%p385) target = $region72
        $region71: #{tpu_custom_call.1} parent=55 // pred_region
          %388 = dma.done [#allocation9], 1024
        $region72: #{tpu_custom_call.1} parent=55 // pred_fallthru
          _
        // Predicated region
        $region73: #{tpu_custom_call.1} parent=55 // pred_check
          %p389 = pneg %p208
        $region74: #{tpu_custom_call.1} parent=55 // pred_check_branch
          %391 = sbr.rel (%p389) target = $region76
        $region75: #{tpu_custom_call.1} parent=55 // pred_region
          %392 = dma.done [#allocation9], 1024
        $region76: #{tpu_custom_call.1} parent=55 // pred_fallthru
          _
        %s393 = sand.u32 %s48, 1
        %s394 = scalar_lea.sflag [#allocation3], %s393
        %s395 = sand.u32 %s48, 1
        %s396 = smul.addr %s395, 16
        %s397 = scalar_lea.vmem [#allocation2], %s396
        %p398 = pneg %p61
        %p399 = pneg %p58
        %p400 = pneg %p82
        %p401 = pneg %p79
        %p402 = pneg %p103
        %p403 = pneg %p100
        %p404 = pneg %p124
        %p405 = pneg %p121
        %p406 = pneg %p145
        %p407 = pneg %p142
        %p408 = pneg %p166
        %p409 = pneg %p163
        %p410 = pneg %p187
        %p411 = pneg %p184
        %p412 = pneg %p208
        %p413 = pneg %p205
        %p414 = pneg %p229
        %p415 = pneg %p226
        %p416 = pneg %p257
        %p417 = pneg %p254
        %s418 = sand.u32 %s244, 1
        %s419 = scalar_lea.sflag [#allocation4], %s418
        %s420 = sand.u32 %s244, 1
        %s421 = smul.addr %s420, 16
        %s422 = scalar_lea.vmem [#allocation11], %s421
        %s423 = smul.u32 2, %s33
        %s424 = smul.u32 %s33, 16
        %s425 = ssub.s32 %s424, 8
        %p426 = scmp.gt.s32.totalorder %s425, 0
        %s427 = scalar_select %p426, %s425, 0
        %p428 = scmp.lt.s32.totalorder %s427, 0
        %s429 = scalar_select %p428, %s427, 0
        %s430 = scalar_lea.vmem %s372, %s429 [#allocation2]
        %v431 = vld [vmem:[%s430] sm:$0xff]
        %v432 = vld [vmem:[%s430 + $0x8] sm:$0xff]
        %s433 = scalar_lea.vmem %s372, %s424 [#allocation2]
        %v434 = vld [vmem:[%s433] sm:$0xff]
        %v435 = vld [vmem:[%s433 + $0x8] sm:$0xff]
        %v436 = vld [vmem:[#allocation7] sm:$0xff]
        %v437 = vld [vmem:[#allocation7 + $0x8] sm:$0xff]
        %v438 = vld [vmem:[#allocation7 + $0x10] sm:$0xff]
        %v439 = vld [vmem:[#allocation7 + $0x18] sm:$0xff]
        %v440 = vld [vmem:[#allocation7 + $0x20] sm:$0xff]
        %v441 = vld [vmem:[#allocation7 + $0x28] sm:$0xff]
        %v442 = vld [vmem:[#allocation7 + $0x30] sm:$0xff]
        %v443 = vld [vmem:[#allocation7 + $0x38] sm:$0xff]
        %v444 = vld [vmem:[%s4] sm:$0x1]
        %v446 = vlaneseq
        %v447 = vshrl.u32 %v446, 7
        %v448 = vsub.s32 0, %v447
        %v449 = vrot.slane %v444, %v448
        %vm451 = vcmask 523264
        %v453 = vsel %vm451, %v431, 0
        %v456 = vsel %vm451, %v432, 0
        %458 = vmatprep.subr.mxu0 0.0
        %459 = vmatpush1.msra.mxu0 %v436
        %460 = vmatprep.subr.mxu0 0.0
        %461 = vmatpush1.msra.mxu0 %v437
        %462 = vmatprep.subr.mxu0 0.0
        %463 = vmatpush1.msra.mxu0 %v438
        %464 = vmatprep.subr.mxu0 0.0
        %465 = vmatpush1.msra.mxu0 %v439
        %466 = vmatprep.subr.mxu0 0.0
        %467 = vmatpush1.msra.mxu0 %v440
        %468 = vmatprep.subr.mxu0 0.0
        %469 = vmatpush1.msra.mxu0 %v441
        %470 = vmatprep.subr.mxu0 0.0
        %471 = vmatpush1.msra.mxu0 %v442
        %472 = vmatprep.subr.mxu0 0.0
        %473 = vmatpush1.msra.mxu0 %v443
        %474 = vmatprep.subr.mxu0 0.0
        %475 = vmatpush1.msra.mxu0 0.0
        %476 = vmatprep.subr.mxu0 0.0
        %477 = vmatpush1.msra.mxu0 0.0
        %478 = vmatprep.subr.mxu0 0.0
        %479 = vmatpush1.msra.mxu0 0.0
        %480 = vmatprep.subr.mxu0 0.0
        %481 = vmatpush1.msra.mxu0 0.0
        %482 = vmatprep.subr.mxu0 0.0
        %483 = vmatpush1.msra.mxu0 0.0
        %484 = vmatprep.subr.mxu0 0.0
        %485 = vmatpush1.msra.mxu0 0.0
        %486 = vmatprep.subr.mxu0 0.0
        %487 = vmatpush1.msra.mxu0 0.0
        %488 = vmatprep.subr.mxu0 0.0
        %489 = vmatpush1.msra.mxu0 0.0
        %490 = vmatprep.subr.mxu0 0.0
        %491 = vmatpush1.msra.mxu0 0.0
        %492 = vmatprep.subr.mxu0 0.0
        %493 = vmatpush1.msra.mxu0 0.0
        %494 = vmatprep.subr.mxu0 0.0
        %495 = vmatpush1.msra.mxu0 0.0
        %496 = vmatprep.subr.mxu0 0.0
        %497 = vmatpush1.msra.mxu0 0.0
        %498 = vmatprep.subr.mxu0 0.0
        %499 = vmatpush1.msra.mxu0 0.0
        %500 = vmatprep.subr.mxu0 0.0
        %501 = vmatpush1.msra.mxu0 0.0
        %502 = vmatprep.subr.mxu0 0.0
        %503 = vmatpush1.msra.mxu0 0.0
        %504 = vmatprep.subr.mxu0 0.0
        %505 = vmatpush1.msra.mxu0 0.0
        %506 = vmatprep.subr.mxu0 0.0
        %507 = vmatpush1.msra.mxu0 0.0
        %508 = vmatprep.subr.mxu0 0.0
        %509 = vmatpush1.msra.mxu0 0.0
        %510 = vmatprep.subr.mxu0 0.0
        %511 = vmatpush1.msra.mxu0 0.0
        %512 = vmatprep.subr.mxu0 0.0
        %513 = vmatpush1.msra.mxu0 0.0
        %514 = vmatprep.subr.mxu0 0.0
        %515 = vmatpush1.msra.mxu0 0.0
        %516 = vmatprep.subr.mxu0 0.0
        %517 = vmatpush1.msra.mxu0 0.0
        %518 = vmatprep.subr.mxu0 0.0
        %519 = vmatpush1.msra.mxu0 0.0
        %520 = vmatprep.subr.mxu0 0.0
        %521 = vmatpush1.msra.mxu0 0.0
        %522 = vmatprep.mubr.f32.mxu0 0.0
        %523 = vmatmul.mubr.f32.gmra.mrb[0].mxu0 %v453
        %v524 = vpop.f32.mrb[0].mxu0
        %v525 = vadd.f32 %v449, %v524
        %v526 = vpop.f32.mrb[0].mxu0
        %527 = vmatprep.mubr.f32.mxu0 0.0
        %528 = vmatmul.mubr.f32.gmra.mrb[0].mxu0 %v456
        %v529 = vpop.f32.mrb[0].mxu0
        %v530 = vadd.f32 %v449, %v529
        %v531 = vpop.f32.mrb[0].mxu0
        %532 = vdwg.mxu0
        %v533 = vld [vmem:[#allocation8] sm:$0xff]
        %v534 = vld [vmem:[#allocation8 + $0x8] sm:$0xff]
        %v535 = vld [vmem:[#allocation8 + $0x10] sm:$0xff]
        %v536 = vld [vmem:[#allocation8 + $0x18] sm:$0xff]
        %v537 = vld [vmem:[#allocation8 + $0x20] sm:$0xff]
        %v538 = vld [vmem:[#allocation8 + $0x28] sm:$0xff]
        %v539 = vld [vmem:[#allocation8 + $0x30] sm:$0xff]
        %v540 = vld [vmem:[#allocation8 + $0x38] sm:$0xff]
        %v541 = vld [vmem:[%s6] sm:$0x1]
        %v543 = vlaneseq
        %v544 = vshrl.u32 %v543, 7
        %v545 = vsub.s32 0, %v544
        %v546 = vrot.slane %v541, %v545
        %548 = vmatprep.subr.mxu0 0.0
        %549 = vmatpush1.msra.mxu0 %v533
        %550 = vmatprep.subr.mxu0 0.0
        %551 = vmatpush1.msra.mxu0 %v534
        %552 = vmatprep.subr.mxu0 0.0
        %553 = vmatpush1.msra.mxu0 %v535
        %554 = vmatprep.subr.mxu0 0.0
        %555 = vmatpush1.msra.mxu0 %v536
        %556 = vmatprep.subr.mxu0 0.0
        %557 = vmatpush1.msra.mxu0 %v537
        %558 = vmatprep.subr.mxu0 0.0
        %559 = vmatpush1.msra.mxu0 %v538
        %560 = vmatprep.subr.mxu0 0.0
        %561 = vmatpush1.msra.mxu0 %v539
        %562 = vmatprep.subr.mxu0 0.0
        %563 = vmatpush1.msra.mxu0 %v540
        %564 = vmatprep.subr.mxu0 0.0
        %565 = vmatpush1.msra.mxu0 0.0
        %566 = vmatprep.subr.mxu0 0.0
        %567 = vmatpush1.msra.mxu0 0.0
        %568 = vmatprep.subr.mxu0 0.0
        %569 = vmatpush1.msra.mxu0 0.0
        %570 = vmatprep.subr.mxu0 0.0
        %571 = vmatpush1.msra.mxu0 0.0
        %572 = vmatprep.subr.mxu0 0.0
        %573 = vmatpush1.msra.mxu0 0.0
        %574 = vmatprep.subr.mxu0 0.0
        %575 = vmatpush1.msra.mxu0 0.0
        %576 = vmatprep.subr.mxu0 0.0
        %577 = vmatpush1.msra.mxu0 0.0
        %578 = vmatprep.subr.mxu0 0.0
        %579 = vmatpush1.msra.mxu0 0.0
        %580 = vmatprep.subr.mxu0 0.0
        %581 = vmatpush1.msra.mxu0 0.0
        %582 = vmatprep.subr.mxu0 0.0
        %583 = vmatpush1.msra.mxu0 0.0
        %584 = vmatprep.subr.mxu0 0.0
        %585 = vmatpush1.msra.mxu0 0.0
        %586 = vmatprep.subr.mxu0 0.0
        %587 = vmatpush1.msra.mxu0 0.0
        %588 = vmatprep.subr.mxu0 0.0
        %589 = vmatpush1.msra.mxu0 0.0
        %590 = vmatprep.subr.mxu0 0.0
        %591 = vmatpush1.msra.mxu0 0.0
        %592 = vmatprep.subr.mxu0 0.0
        %593 = vmatpush1.msra.mxu0 0.0
        %594 = vmatprep.subr.mxu0 0.0
        %595 = vmatpush1.msra.mxu0 0.0
        %596 = vmatprep.subr.mxu0 0.0
        %597 = vmatpush1.msra.mxu0 0.0
        %598 = vmatprep.subr.mxu0 0.0
        %599 = vmatpush1.msra.mxu0 0.0
        %600 = vmatprep.subr.mxu0 0.0
        %601 = vmatpush1.msra.mxu0 0.0
        %602 = vmatprep.subr.mxu0 0.0
        %603 = vmatpush1.msra.mxu0 0.0
        %604 = vmatprep.subr.mxu0 0.0
        %605 = vmatpush1.msra.mxu0 0.0
        %606 = vmatprep.subr.mxu0 0.0
        %607 = vmatpush1.msra.mxu0 0.0
        %608 = vmatprep.subr.mxu0 0.0
        %609 = vmatpush1.msra.mxu0 0.0
        %610 = vmatprep.subr.mxu0 0.0
        %611 = vmatpush1.msra.mxu0 0.0
        %612 = vmatprep.mubr.f32.mxu0 0.0
        %613 = vmatmul.mubr.f32.gmra.mrb[0].mxu0 %v453
        %v614 = vpop.f32.mrb[0].mxu0
        %v615 = vadd.f32 %v546, %v614
        %v616 = vpop.f32.mrb[0].mxu0
        %617 = vmatprep.mubr.f32.mxu0 0.0
        %618 = vmatmul.mubr.f32.gmra.mrb[0].mxu0 %v456
        %v619 = vpop.f32.mrb[0].mxu0
        %v620 = vadd.f32 %v546, %v619
        %v621 = vpop.f32.mrb[0].mxu0
        %622 = vdwg.mxu0
        %v623 = vld [vmem:[#allocation5] sm:$0xff]
        %v624 = vld [vmem:[#allocation5 + $0x8] sm:$0xff]
        %v625 = vld [vmem:[#allocation5 + $0x10] sm:$0xff]
        %v626 = vld [vmem:[#allocation5 + $0x18] sm:$0xff]
        %v627 = vld [vmem:[#allocation5 + $0x20] sm:$0xff]
        %v628 = vld [vmem:[#allocation5 + $0x28] sm:$0xff]
        %v629 = vld [vmem:[#allocation5 + $0x30] sm:$0xff]
        %v630 = vld [vmem:[#allocation5 + $0x38] sm:$0xff]
        %v631 = vld [vmem:[%s2] sm:$0x1]
        %v633 = vlaneseq
        %v634 = vshrl.u32 %v633, 7
        %v635 = vsub.s32 0, %v634
        %v636 = vrot.slane %v631, %v635
        %v639 = vsel %vm451, %v434, 0
        %v642 = vsel %vm451, %v435, 0
        %644 = vmatprep.subr.mxu0 0.0
        %645 = vmatpush1.msra.mxu0 %v623
        %646 = vmatprep.subr.mxu0 0.0
        %647 = vmatpush1.msra.mxu0 %v624
        %648 = vmatprep.subr.mxu0 0.0
        %649 = vmatpush1.msra.mxu0 %v625
        %650 = vmatprep.subr.mxu0 0.0
        %651 = vmatpush1.msra.mxu0 %v626
        %652 = vmatprep.subr.mxu0 0.0
        %653 = vmatpush1.msra.mxu0 %v627
        %654 = vmatprep.subr.mxu0 0.0
        %655 = vmatpush1.msra.mxu0 %v628
        %656 = vmatprep.subr.mxu0 0.0
        %657 = vmatpush1.msra.mxu0 %v629
        %658 = vmatprep.subr.mxu0 0.0
        %659 = vmatpush1.msra.mxu0 %v630
        %660 = vmatprep.subr.mxu0 0.0
        %661 = vmatpush1.msra.mxu0 0.0
        %662 = vmatprep.subr.mxu0 0.0
        %663 = vmatpush1.msra.mxu0 0.0
        %664 = vmatprep.subr.mxu0 0.0
        %665 = vmatpush1.msra.mxu0 0.0
        %666 = vmatprep.subr.mxu0 0.0
        %667 = vmatpush1.msra.mxu0 0.0
        %668 = vmatprep.subr.mxu0 0.0
        %669 = vmatpush1.msra.mxu0 0.0
        %670 = vmatprep.subr.mxu0 0.0
        %671 = vmatpush1.msra.mxu0 0.0
        %672 = vmatprep.subr.mxu0 0.0
        %673 = vmatpush1.msra.mxu0 0.0
        %674 = vmatprep.subr.mxu0 0.0
        %675 = vmatpush1.msra.mxu0 0.0
        %676 = vmatprep.subr.mxu0 0.0
        %677 = vmatpush1.msra.mxu0 0.0
        %678 = vmatprep.subr.mxu0 0.0
        %679 = vmatpush1.msra.mxu0 0.0
        %680 = vmatprep.subr.mxu0 0.0
        %681 = vmatpush1.msra.mxu0 0.0
        %682 = vmatprep.subr.mxu0 0.0
        %683 = vmatpush1.msra.mxu0 0.0
        %684 = vmatprep.subr.mxu0 0.0
        %685 = vmatpush1.msra.mxu0 0.0
        %686 = vmatprep.subr.mxu0 0.0
        %687 = vmatpush1.msra.mxu0 0.0
        %688 = vmatprep.subr.mxu0 0.0
        %689 = vmatpush1.msra.mxu0 0.0
        %690 = vmatprep.subr.mxu0 0.0
        %691 = vmatpush1.msra.mxu0 0.0
        %692 = vmatprep.subr.mxu0 0.0
        %693 = vmatpush1.msra.mxu0 0.0
        %694 = vmatprep.subr.mxu0 0.0
        %695 = vmatpush1.msra.mxu0 0.0
        %696 = vmatprep.subr.mxu0 0.0
        %697 = vmatpush1.msra.mxu0 0.0
        %698 = vmatprep.subr.mxu0 0.0
        %699 = vmatpush1.msra.mxu0 0.0
        %700 = vmatprep.subr.mxu0 0.0
        %701 = vmatpush1.msra.mxu0 0.0
        %702 = vmatprep.subr.mxu0 0.0
        %703 = vmatpush1.msra.mxu0 0.0
        %704 = vmatprep.subr.mxu0 0.0
        %705 = vmatpush1.msra.mxu0 0.0
        %706 = vmatprep.subr.mxu0 0.0
        %707 = vmatpush1.msra.mxu0 0.0
        %708 = vmatprep.mubr.f32.mxu0 0.0
        %709 = vmatmul.mubr.f32.gmra.mrb[0].mxu0 %v639
        %v710 = vpop.f32.mrb[0].mxu0
        %v711 = vadd.f32 %v636, %v710
        %v712 = vpop.f32.mrb[0].mxu0
        %713 = vmatprep.mubr.f32.mxu0 0.0
        %714 = vmatmul.mubr.f32.gmra.mrb[0].mxu0 %v642
        %v715 = vpop.f32.mrb[0].mxu0
        %v716 = vadd.f32 %v636, %v715
        %v717 = vpop.f32.mrb[0].mxu0
        %718 = vdwg.mxu0
        %v719 = vmul.f32 %v711, 0.25
        %v720 = vmul.f32 %v716, 0.25
        %v721 = vlaneseq
        %v722 = vshrl.u32 %v721, 7
        %v723 = vadd.s32 %v722, 8
        %v724 = vstv %s424
        %v725 = vadd.s32 %v724, %v722
        %v726 = vadd.s32 %v724, %v723
        %v727 = vlaneseq
        %v728 = vand.u32 %v727, 127
        %v729 = vstv %s429
        %v730 = vadd.s32 %v729, %v728
        %v731 = vsub.s32 %v725, %v730
        %v732 = vsub.s32 %v726, %v730
        %vm733 = vcmp.lt.s32.totalorder %v731, 0
        %v734 = vsub.s32 0, %v731
        %v735 = vsel %vm733, %v734, %v731
        %vm736 = vcmp.lt.s32.totalorder %v732, 0
        %v737 = vsub.s32 0, %v732
        %v738 = vsel %vm736, %v737, %v732
        %vm739 = vcmp.le.s32.totalorder %v735, 2
        %vm740 = vcmp.le.s32.totalorder %v738, 2
        %vm741 = vcmask 130048
        %v743 = vsel %vm741, %v719, 0
        %v746 = vsel %vm741, %v720, 0
        %v749 = vsel %vm741, %v525, 0
        %v752 = vsel %vm741, %v530, 0
        %754 = vmatprep.subr.mxu0 0.0
        %755 = vmatpush1.xpose.msra.mxu0 %v749
        %756 = vmatprep.subr.mxu0 0.0
        %757 = vmatpush1.xpose.msra.mxu0 %v752
        %758 = vmatprep.subr.mxu0 0.0
        %759 = vmatpush1.xpose.msra.mxu0 0.0
        %760 = vmatprep.subr.mxu0 0.0
        %761 = vmatpush1.xpose.msra.mxu0 0.0
        %762 = vmatprep.subr.mxu0 0.0
        %763 = vmatpush1.xpose.msra.mxu0 0.0
        %764 = vmatprep.subr.mxu0 0.0
        %765 = vmatpush1.xpose.msra.mxu0 0.0
        %766 = vmatprep.subr.mxu0 0.0
        %767 = vmatpush1.xpose.msra.mxu0 0.0
        %768 = vmatprep.subr.mxu0 0.0
        %769 = vmatpush1.xpose.msra.mxu0 0.0
        %770 = vmatprep.subr.mxu0 0.0
        %771 = vmatpush1.xpose.msra.mxu0 0.0
        %772 = vmatprep.subr.mxu0 0.0
        %773 = vmatpush1.xpose.msra.mxu0 0.0
        %774 = vmatprep.subr.mxu0 0.0
        %775 = vmatpush1.xpose.msra.mxu0 0.0
        %776 = vmatprep.subr.mxu0 0.0
        %777 = vmatpush1.xpose.msra.mxu0 0.0
        %778 = vmatprep.subr.mxu0 0.0
        %779 = vmatpush1.xpose.msra.mxu0 0.0
        %780 = vmatprep.subr.mxu0 0.0
        %781 = vmatpush1.xpose.msra.mxu0 0.0
        %782 = vmatprep.subr.mxu0 0.0
        %783 = vmatpush1.xpose.msra.mxu0 0.0
        %784 = vmatprep.subr.mxu0 0.0
        %785 = vmatpush1.xpose.msra.mxu0 0.0
        %786 = vmatprep.subr.mxu0 0.0
        %787 = vmatpush1.xpose.msra.mxu0 0.0
        %788 = vmatprep.subr.mxu0 0.0
        %789 = vmatpush1.xpose.msra.mxu0 0.0
        %790 = vmatprep.subr.mxu0 0.0
        %791 = vmatpush1.xpose.msra.mxu0 0.0
        %792 = vmatprep.subr.mxu0 0.0
        %793 = vmatpush1.xpose.msra.mxu0 0.0
        %794 = vmatprep.subr.mxu0 0.0
        %795 = vmatpush1.xpose.msra.mxu0 0.0
        %796 = vmatprep.subr.mxu0 0.0
        %797 = vmatpush1.xpose.msra.mxu0 0.0
        %798 = vmatprep.subr.mxu0 0.0
        %799 = vmatpush1.xpose.msra.mxu0 0.0
        %800 = vmatprep.subr.mxu0 0.0
        %801 = vmatpush1.xpose.msra.mxu0 0.0
        %802 = vmatprep.subr.mxu0 0.0
        %803 = vmatpush1.xpose.msra.mxu0 0.0
        %804 = vmatprep.subr.mxu0 0.0
        %805 = vmatpush1.xpose.msra.mxu0 0.0
        %806 = vmatprep.subr.mxu0 0.0
        %807 = vmatpush1.xpose.msra.mxu0 0.0
        %808 = vmatprep.subr.mxu0 0.0
        %809 = vmatpush1.xpose.msra.mxu0 0.0
        %810 = vmatprep.subr.mxu0 0.0
        %811 = vmatpush1.xpose.msra.mxu0 0.0
        %812 = vmatprep.subr.mxu0 0.0
        %813 = vmatpush1.xpose.msra.mxu0 0.0
        %814 = vmatprep.subr.mxu0 0.0
        %815 = vmatpush1.xpose.msra.mxu0 0.0
        %816 = vmatprep.subr.mxu0 0.0
        %817 = vmatpush1.xpose.msra.mxu0 0.0
        %818 = vmatprep.mubr.f32.mxu0 0.0
        %819 = vmatmul.mubr.f32.gmra.mrb[0].mxu0 %v743
        %v820 = vpop.f32.mrb[0].mxu0
        %v821 = vadd.f32 0.0, %v820
        %v822 = vpop.f32.mrb[0].mxu0
        %823 = vmatprep.mubr.f32.mxu0 0.0
        %824 = vmatmul.mubr.f32.gmra.mrb[0].mxu0 %v746
        %v825 = vpop.f32.mrb[0].mxu0
        %v826 = vadd.f32 0.0, %v825
        %v827 = vpop.f32.mrb[0].mxu0
        %828 = vdwg.mxu0
        %v829 = vsel %vm739, %v821, -1e+30
        %v830 = vsel %vm740, %v826, -1e+30
        %v831 = vsel %vm741, %v829, -inf
        %832 = vmax.xlane.f32.xlu0 %v831
        %v833 = vpop.xlane.xlu0 %832
        %v834 = vsel %vm741, %v830, -inf
        %835 = vmax.xlane.f32.xlu0 %v834
        %v836 = vpop.xlane.xlu0 %835
        %v837 = vsub.f32 %v829, %v833
        %v838 = vsub.f32 %v830, %v836
        %v839 = vmul.f32 %v837, 1.442695
        %v840 = vpow.pop %v839
        %v841 = vmul.f32 %v838, 1.442695
        %v842 = vpow.pop %v841
        %v843 = vsel %vm741, %v840, 0.0
        %844 = vadd.xlane.f32.xlu0 %v843
        %v845 = vpop.xlane.xlu0 %844
        %v846 = vsel %vm741, %v842, 0.0
        %847 = vadd.xlane.f32.xlu0 %v846
        %v848 = vpop.xlane.xlu0 %847
        %v849 = vrcp.pop %v845
        %v850 = vrcp.pop %v848
        %v851 = vmul.f32 %v840, %v849
        %v852 = vmul.f32 %v842, %v850
        %v854 = vsel %vm741, %v851, 0
        %v857 = vsel %vm741, %v852, 0
        %859 = vmatprep.subr.mxu0 0.0
        %860 = vmatpush1.msra.mxu0 %v615
        %861 = vmatprep.subr.mxu0 0.0
        %862 = vmatpush1.msra.mxu0 %v620
        %863 = vmatprep.subr.mxu0 0.0
        %864 = vmatpush1.msra.mxu0 0.0
        %865 = vmatprep.subr.mxu0 0.0
        %866 = vmatpush1.msra.mxu0 0.0
        %867 = vmatprep.subr.mxu0 0.0
        %868 = vmatpush1.msra.mxu0 0.0
        %869 = vmatprep.subr.mxu0 0.0
        %870 = vmatpush1.msra.mxu0 0.0
        %871 = vmatprep.subr.mxu0 0.0
        %872 = vmatpush1.msra.mxu0 0.0
        %873 = vmatprep.subr.mxu0 0.0
        %874 = vmatpush1.msra.mxu0 0.0
        %875 = vmatprep.subr.mxu0 0.0
        %876 = vmatpush1.msra.mxu0 0.0
        %877 = vmatprep.subr.mxu0 0.0
        %878 = vmatpush1.msra.mxu0 0.0
        %879 = vmatprep.subr.mxu0 0.0
        %880 = vmatpush1.msra.mxu0 0.0
        %881 = vmatprep.subr.mxu0 0.0
        %882 = vmatpush1.msra.mxu0 0.0
        %883 = vmatprep.subr.mxu0 0.0
        %884 = vmatpush1.msra.mxu0 0.0
        %885 = vmatprep.subr.mxu0 0.0
        %886 = vmatpush1.msra.mxu0 0.0
        %887 = vmatprep.subr.mxu0 0.0
        %888 = vmatpush1.msra.mxu0 0.0
        %889 = vmatprep.subr.mxu0 0.0
        %890 = vmatpush1.msra.mxu0 0.0
        %891 = vmatprep.subr.mxu0 0.0
        %892 = vmatpush1.msra.mxu0 0.0
        %893 = vmatprep.subr.mxu0 0.0
        %894 = vmatpush1.msra.mxu0 0.0
        %895 = vmatprep.subr.mxu0 0.0
        %896 = vmatpush1.msra.mxu0 0.0
        %897 = vmatprep.subr.mxu0 0.0
        %898 = vmatpush1.msra.mxu0 0.0
        %899 = vmatprep.subr.mxu0 0.0
        %900 = vmatpush1.msra.mxu0 0.0
        %901 = vmatprep.subr.mxu0 0.0
        %902 = vmatpush1.msra.mxu0 0.0
        %903 = vmatprep.subr.mxu0 0.0
        %904 = vmatpush1.msra.mxu0 0.0
        %905 = vmatprep.subr.mxu0 0.0
        %906 = vmatpush1.msra.mxu0 0.0
        %907 = vmatprep.subr.mxu0 0.0
        %908 = vmatpush1.msra.mxu0 0.0
        %909 = vmatprep.subr.mxu0 0.0
        %910 = vmatpush1.msra.mxu0 0.0
        %911 = vmatprep.subr.mxu0 0.0
        %912 = vmatpush1.msra.mxu0 0.0
        %913 = vmatprep.subr.mxu0 0.0
        %914 = vmatpush1.msra.mxu0 0.0
        %915 = vmatprep.subr.mxu0 0.0
        %916 = vmatpush1.msra.mxu0 0.0
        %917 = vmatprep.subr.mxu0 0.0
        %918 = vmatpush1.msra.mxu0 0.0
        %919 = vmatprep.subr.mxu0 0.0
        %920 = vmatpush1.msra.mxu0 0.0
        %921 = vmatprep.subr.mxu0 0.0
        %922 = vmatpush1.msra.mxu0 0.0
        %923 = vmatprep.mubr.f32.mxu0 0.0
        %924 = vmatmul.mubr.f32.gmra.mrb[0].mxu0 %v854
        %v925 = vpop.f32.mrb[0].mxu0
        %v926 = vadd.f32 0.0, %v925
        %v927 = vpop.f32.mrb[0].mxu0
        %928 = vmatprep.mubr.f32.mxu0 0.0
        %929 = vmatmul.mubr.f32.gmra.mrb[0].mxu0 %v857
        %v930 = vpop.f32.mrb[0].mxu0
        %v931 = vadd.f32 0.0, %v930
        %v932 = vpop.f32.mrb[0].mxu0
        %933 = vdwg.mxu0
        %934 = vrot.lane.b32.xlu0 %v719, 112
        %v935 = vpop.permute.xlu0 %934
        %936 = vrot.lane.b32.xlu0 %v720, 112
        %v937 = vpop.permute.xlu0 %936
        %938 = vrot.lane.b32.xlu0 %v525, 112
        %v939 = vpop.permute.xlu0 %938
        %940 = vrot.lane.b32.xlu0 %v530, 112
        %v941 = vpop.permute.xlu0 %940
        %v942 = vsel %vm741, %v935, 0
        %v944 = vsel %vm741, %v937, 0
        %v946 = vsel %vm741, %v939, 0
        %v948 = vsel %vm741, %v941, 0
        %950 = vmatprep.subr.mxu0 0.0
        %951 = vmatpush1.xpose.msra.mxu0 %v946
        %952 = vmatprep.subr.mxu0 0.0
        %953 = vmatpush1.xpose.msra.mxu0 %v948
        %954 = vmatprep.subr.mxu0 0.0
        %955 = vmatpush1.xpose.msra.mxu0 0.0
        %956 = vmatprep.subr.mxu0 0.0
        %957 = vmatpush1.xpose.msra.mxu0 0.0
        %958 = vmatprep.subr.mxu0 0.0
        %959 = vmatpush1.xpose.msra.mxu0 0.0
        %960 = vmatprep.subr.mxu0 0.0
        %961 = vmatpush1.xpose.msra.mxu0 0.0
        %962 = vmatprep.subr.mxu0 0.0
        %963 = vmatpush1.xpose.msra.mxu0 0.0
        %964 = vmatprep.subr.mxu0 0.0
        %965 = vmatpush1.xpose.msra.mxu0 0.0
        %966 = vmatprep.subr.mxu0 0.0
        %967 = vmatpush1.xpose.msra.mxu0 0.0
        %968 = vmatprep.subr.mxu0 0.0
        %969 = vmatpush1.xpose.msra.mxu0 0.0
        %970 = vmatprep.subr.mxu0 0.0
        %971 = vmatpush1.xpose.msra.mxu0 0.0
        %972 = vmatprep.subr.mxu0 0.0
        %973 = vmatpush1.xpose.msra.mxu0 0.0
        %974 = vmatprep.subr.mxu0 0.0
        %975 = vmatpush1.xpose.msra.mxu0 0.0
        %976 = vmatprep.subr.mxu0 0.0
        %977 = vmatpush1.xpose.msra.mxu0 0.0
        %978 = vmatprep.subr.mxu0 0.0
        %979 = vmatpush1.xpose.msra.mxu0 0.0
        %980 = vmatprep.subr.mxu0 0.0
        %981 = vmatpush1.xpose.msra.mxu0 0.0
        %982 = vmatprep.subr.mxu0 0.0
        %983 = vmatpush1.xpose.msra.mxu0 0.0
        %984 = vmatprep.subr.mxu0 0.0
        %985 = vmatpush1.xpose.msra.mxu0 0.0
        %986 = vmatprep.subr.mxu0 0.0
        %987 = vmatpush1.xpose.msra.mxu0 0.0
        %988 = vmatprep.subr.mxu0 0.0
        %989 = vmatpush1.xpose.msra.mxu0 0.0
        %990 = vmatprep.subr.mxu0 0.0
        %991 = vmatpush1.xpose.msra.mxu0 0.0
        %992 = vmatprep.subr.mxu0 0.0
        %993 = vmatpush1.xpose.msra.mxu0 0.0
        %994 = vmatprep.subr.mxu0 0.0
        %995 = vmatpush1.xpose.msra.mxu0 0.0
        %996 = vmatprep.subr.mxu0 0.0
        %997 = vmatpush1.xpose.msra.mxu0 0.0
        %998 = vmatprep.subr.mxu0 0.0
        %999 = vmatpush1.xpose.msra.mxu0 0.0
        %1000 = vmatprep.subr.mxu0 0.0
        %1001 = vmatpush1.xpose.msra.mxu0 0.0
        %1002 = vmatprep.subr.mxu0 0.0
        %1003 = vmatpush1.xpose.msra.mxu0 0.0
        %1004 = vmatprep.subr.mxu0 0.0
        %1005 = vmatpush1.xpose.msra.mxu0 0.0
        %1006 = vmatprep.subr.mxu0 0.0
        %1007 = vmatpush1.xpose.msra.mxu0 0.0
        %1008 = vmatprep.subr.mxu0 0.0
        %1009 = vmatpush1.xpose.msra.mxu0 0.0
        %1010 = vmatprep.subr.mxu0 0.0
        %1011 = vmatpush1.xpose.msra.mxu0 0.0
        %1012 = vmatprep.subr.mxu0 0.0
        %1013 = vmatpush1.xpose.msra.mxu0 0.0
        %1014 = vmatprep.mubr.f32.mxu0 0.0
        %1015 = vmatmul.mubr.f32.gmra.mrb[0].mxu0 %v942
        %v1016 = vpop.f32.mrb[0].mxu0
        %v1017 = vadd.f32 0.0, %v1016
        %v1018 = vpop.f32.mrb[0].mxu0
        %1019 = vmatprep.mubr.f32.mxu0 0.0
        %1020 = vmatmul.mubr.f32.gmra.mrb[0].mxu0 %v944
        %v1021 = vpop.f32.mrb[0].mxu0
        %v1022 = vadd.f32 0.0, %v1021
        %v1023 = vpop.f32.mrb[0].mxu0
        %1024 = vdwg.mxu0
        %v1025 = vsel %vm739, %v1017, -1e+30
        %v1026 = vsel %vm740, %v1022, -1e+30
        %v1027 = vsel %vm741, %v1025, -inf
        %1028 = vmax.xlane.f32.xlu0 %v1027
        %v1029 = vpop.xlane.xlu0 %1028
        %v1030 = vsel %vm741, %v1026, -inf
        %1031 = vmax.xlane.f32.xlu0 %v1030
        %v1032 = vpop.xlane.xlu0 %1031
        %v1033 = vsub.f32 %v1025, %v1029
        %v1034 = vsub.f32 %v1026, %v1032
        %v1035 = vmul.f32 %v1033, 1.442695
        %v1036 = vpow.pop %v1035
        %v1037 = vmul.f32 %v1034, 1.442695
        %v1038 = vpow.pop %v1037
        %v1039 = vsel %vm741, %v1036, 0.0
        %1040 = vadd.xlane.f32.xlu0 %v1039
        %v1041 = vpop.xlane.xlu0 %1040
        %v1042 = vsel %vm741, %v1038, 0.0
        %1043 = vadd.xlane.f32.xlu0 %v1042
        %v1044 = vpop.xlane.xlu0 %1043
        %v1045 = vrcp.pop %v1041
        %v1046 = vrcp.pop %v1044
        %v1047 = vmul.f32 %v1036, %v1045
        %v1048 = vmul.f32 %v1038, %v1046
        %1051 = vrot.lane.b32.xlu0 %v615, 112
        %v1052 = vpop.permute.xlu0 %1051
        %1053 = vrot.lane.b32.xlu0 %v620, 112
        %v1054 = vpop.permute.xlu0 %1053
        %v1058 = vsel %vm741, %v1047, 0
        %v1061 = vsel %vm741, %v1048, 0
        %1063 = vmatprep.subr.mxu0 0.0
        %1064 = vmatpush1.msra.mxu0 %v1052
        %1065 = vmatprep.subr.mxu0 0.0
        %1066 = vmatpush1.msra.mxu0 %v1054
        %1067 = vmatprep.subr.mxu0 0.0
        %1068 = vmatpush1.msra.mxu0 0.0
        %1069 = vmatprep.subr.mxu0 0.0
        %1070 = vmatpush1.msra.mxu0 0.0
        %1071 = vmatprep.subr.mxu0 0.0
        %1072 = vmatpush1.msra.mxu0 0.0
        %1073 = vmatprep.subr.mxu0 0.0
        %1074 = vmatpush1.msra.mxu0 0.0
        %1075 = vmatprep.subr.mxu0 0.0
        %1076 = vmatpush1.msra.mxu0 0.0
        %1077 = vmatprep.subr.mxu0 0.0
        %1078 = vmatpush1.msra.mxu0 0.0
        %1079 = vmatprep.subr.mxu0 0.0
        %1080 = vmatpush1.msra.mxu0 0.0
        %1081 = vmatprep.subr.mxu0 0.0
        %1082 = vmatpush1.msra.mxu0 0.0
        %1083 = vmatprep.subr.mxu0 0.0
        %1084 = vmatpush1.msra.mxu0 0.0
        %1085 = vmatprep.subr.mxu0 0.0
        %1086 = vmatpush1.msra.mxu0 0.0
        %1087 = vmatprep.subr.mxu0 0.0
        %1088 = vmatpush1.msra.mxu0 0.0
        %1089 = vmatprep.subr.mxu0 0.0
        %1090 = vmatpush1.msra.mxu0 0.0
        %1091 = vmatprep.subr.mxu0 0.0
        %1092 = vmatpush1.msra.mxu0 0.0
        %1093 = vmatprep.subr.mxu0 0.0
        %1094 = vmatpush1.msra.mxu0 0.0
        %1095 = vmatprep.subr.mxu0 0.0
        %1096 = vmatpush1.msra.mxu0 0.0
        %1097 = vmatprep.subr.mxu0 0.0
        %1098 = vmatpush1.msra.mxu0 0.0
        %1099 = vmatprep.subr.mxu0 0.0
        %1100 = vmatpush1.msra.mxu0 0.0
        %1101 = vmatprep.subr.mxu0 0.0
        %1102 = vmatpush1.msra.mxu0 0.0
        %1103 = vmatprep.subr.mxu0 0.0
        %1104 = vmatpush1.msra.mxu0 0.0
        %1105 = vmatprep.subr.mxu0 0.0
        %1106 = vmatpush1.msra.mxu0 0.0
        %1107 = vmatprep.subr.mxu0 0.0
        %1108 = vmatpush1.msra.mxu0 0.0
        %1109 = vmatprep.subr.mxu0 0.0
        %1110 = vmatpush1.msra.mxu0 0.0
        %1111 = vmatprep.subr.mxu0 0.0
        %1112 = vmatpush1.msra.mxu0 0.0
        %1113 = vmatprep.subr.mxu0 0.0
        %1114 = vmatpush1.msra.mxu0 0.0
        %1115 = vmatprep.subr.mxu0 0.0
        %1116 = vmatpush1.msra.mxu0 0.0
        %1117 = vmatprep.subr.mxu0 0.0
        %1118 = vmatpush1.msra.mxu0 0.0
        %1119 = vmatprep.subr.mxu0 0.0
        %1120 = vmatpush1.msra.mxu0 0.0
        %1121 = vmatprep.subr.mxu0 0.0
        %1122 = vmatpush1.msra.mxu0 0.0
        %1123 = vmatprep.subr.mxu0 0.0
        %1124 = vmatpush1.msra.mxu0 0.0
        %1125 = vmatprep.subr.mxu0 0.0
        %1126 = vmatpush1.msra.mxu0 0.0
        %1127 = vmatprep.mubr.f32.mxu0 0.0
        %1128 = vmatmul.mubr.f32.gmra.mrb[0].mxu0 %v1058
        %v1129 = vpop.f32.mrb[0].mxu0
        %v1130 = vadd.f32 0.0, %v1129
        %v1131 = vpop.f32.mrb[0].mxu0
        %1132 = vmatprep.mubr.f32.mxu0 0.0
        %1133 = vmatmul.mubr.f32.gmra.mrb[0].mxu0 %v1061
        %v1134 = vpop.f32.mrb[0].mxu0
        %v1135 = vadd.f32 0.0, %v1134
        %v1136 = vpop.f32.mrb[0].mxu0
        %1137 = vdwg.mxu0
        %1138 = vrot.lane.b32.xlu0 %v719, 96
        %v1139 = vpop.permute.xlu0 %1138
        %1140 = vrot.lane.b32.xlu0 %v720, 96
        %v1141 = vpop.permute.xlu0 %1140
        %1142 = vrot.lane.b32.xlu0 %v525, 96
        %v1143 = vpop.permute.xlu0 %1142
        %1144 = vrot.lane.b32.xlu0 %v530, 96
        %v1145 = vpop.permute.xlu0 %1144
        %v1146 = vsel %vm741, %v1139, 0
        %v1148 = vsel %vm741, %v1141, 0
        %v1150 = vsel %vm741, %v1143, 0
        %v1152 = vsel %vm741, %v1145, 0
        %1154 = vmatprep.subr.mxu0 0.0
        %1155 = vmatpush1.xpose.msra.mxu0 %v1150
        %1156 = vmatprep.subr.mxu0 0.0
        %1157 = vmatpush1.xpose.msra.mxu0 %v1152
        %1158 = vmatprep.subr.mxu0 0.0
        %1159 = vmatpush1.xpose.msra.mxu0 0.0
        %1160 = vmatprep.subr.mxu0 0.0
        %1161 = vmatpush1.xpose.msra.mxu0 0.0
        %1162 = vmatprep.subr.mxu0 0.0
        %1163 = vmatpush1.xpose.msra.mxu0 0.0
        %1164 = vmatprep.subr.mxu0 0.0
        %1165 = vmatpush1.xpose.msra.mxu0 0.0
        %1166 = vmatprep.subr.mxu0 0.0
        %1167 = vmatpush1.xpose.msra.mxu0 0.0
        %1168 = vmatprep.subr.mxu0 0.0
        %1169 = vmatpush1.xpose.msra.mxu0 0.0
        %1170 = vmatprep.subr.mxu0 0.0
        %1171 = vmatpush1.xpose.msra.mxu0 0.0
        %1172 = vmatprep.subr.mxu0 0.0
        %1173 = vmatpush1.xpose.msra.mxu0 0.0
        %1174 = vmatprep.subr.mxu0 0.0
        %1175 = vmatpush1.xpose.msra.mxu0 0.0
        %1176 = vmatprep.subr.mxu0 0.0
        %1177 = vmatpush1.xpose.msra.mxu0 0.0
        %1178 = vmatprep.subr.mxu0 0.0
        %1179 = vmatpush1.xpose.msra.mxu0 0.0
        %1180 = vmatprep.subr.mxu0 0.0
        %1181 = vmatpush1.xpose.msra.mxu0 0.0
        %1182 = vmatprep.subr.mxu0 0.0
        %1183 = vmatpush1.xpose.msra.mxu0 0.0
        %1184 = vmatprep.subr.mxu0 0.0
        %1185 = vmatpush1.xpose.msra.mxu0 0.0
        %1186 = vmatprep.subr.mxu0 0.0
        %1187 = vmatpush1.xpose.msra.mxu0 0.0
        %1188 = vmatprep.subr.mxu0 0.0
        %1189 = vmatpush1.xpose.msra.mxu0 0.0
        %1190 = vmatprep.subr.mxu0 0.0
        %1191 = vmatpush1.xpose.msra.mxu0 0.0
        %1192 = vmatprep.subr.mxu0 0.0
        %1193 = vmatpush1.xpose.msra.mxu0 0.0
        %1194 = vmatprep.subr.mxu0 0.0
        %1195 = vmatpush1.xpose.msra.mxu0 0.0
        %1196 = vmatprep.subr.mxu0 0.0
        %1197 = vmatpush1.xpose.msra.mxu0 0.0
        %1198 = vmatprep.subr.mxu0 0.0
        %1199 = vmatpush1.xpose.msra.mxu0 0.0
        %1200 = vmatprep.subr.mxu0 0.0
        %1201 = vmatpush1.xpose.msra.mxu0 0.0
        %1202 = vmatprep.subr.mxu0 0.0
        %1203 = vmatpush1.xpose.msra.mxu0 0.0
        %1204 = vmatprep.subr.mxu0 0.0
        %1205 = vmatpush1.xpose.msra.mxu0 0.0
        %1206 = vmatprep.subr.mxu0 0.0
        %1207 = vmatpush1.xpose.msra.mxu0 0.0
        %1208 = vmatprep.subr.mxu0 0.0
        %1209 = vmatpush1.xpose.msra.mxu0 0.0
        %1210 = vmatprep.subr.mxu0 0.0
        %1211 = vmatpush1.xpose.msra.mxu0 0.0
        %1212 = vmatprep.subr.mxu0 0.0
        %1213 = vmatpush1.xpose.msra.mxu0 0.0
        %1214 = vmatprep.subr.mxu0 0.0
        %1215 = vmatpush1.xpose.msra.mxu0 0.0
        %1216 = vmatprep.subr.mxu0 0.0
        %1217 = vmatpush1.xpose.msra.mxu0 0.0
        %1218 = vmatprep.mubr.f32.mxu0 0.0
        %1219 = vmatmul.mubr.f32.gmra.mrb[0].mxu0 %v1146
        %v1220 = vpop.f32.mrb[0].mxu0
        %v1221 = vadd.f32 0.0, %v1220
        %v1222 = vpop.f32.mrb[0].mxu0
        %1223 = vmatprep.mubr.f32.mxu0 0.0
        %1224 = vmatmul.mubr.f32.gmra.mrb[0].mxu0 %v1148
        %v1225 = vpop.f32.mrb[0].mxu0
        %v1226 = vadd.f32 0.0, %v1225
        %v1227 = vpop.f32.mrb[0].mxu0
        %1228 = vdwg.mxu0
        %v1229 = vsel %vm739, %v1221, -1e+30
        %v1230 = vsel %vm740, %v1226, -1e+30
        %v1231 = vsel %vm741, %v1229, -inf
        %1232 = vmax.xlane.f32.xlu0 %v1231
        %v1233 = vpop.xlane.xlu0 %1232
        %v1234 = vsel %vm741, %v1230, -inf
        %1235 = vmax.xlane.f32.xlu0 %v1234
        %v1236 = vpop.xlane.xlu0 %1235
        %v1237 = vsub.f32 %v1229, %v1233
        %v1238 = vsub.f32 %v1230, %v1236
        %v1239 = vmul.f32 %v1237, 1.442695
        %v1240 = vpow.pop %v1239
        %v1241 = vmul.f32 %v1238, 1.442695
        %v1242 = vpow.pop %v1241
        %v1243 = vsel %vm741, %v1240, 0.0
        %1244 = vadd.xlane.f32.xlu0 %v1243
        %v1245 = vpop.xlane.xlu0 %1244
        %v1246 = vsel %vm741, %v1242, 0.0
        %1247 = vadd.xlane.f32.xlu0 %v1246
        %v1248 = vpop.xlane.xlu0 %1247
        %v1249 = vrcp.pop %v1245
        %v1250 = vrcp.pop %v1248
        %v1251 = vmul.f32 %v1240, %v1249
        %v1252 = vmul.f32 %v1242, %v1250
        %1253 = vrot.lane.b32.xlu0 %v615, 96
        %v1254 = vpop.permute.xlu0 %1253
        %1255 = vrot.lane.b32.xlu0 %v620, 96
        %v1256 = vpop.permute.xlu0 %1255
        %v1260 = vsel %vm741, %v1251, 0
        %v1263 = vsel %vm741, %v1252, 0
        %1265 = vmatprep.subr.mxu0 0.0
        %1266 = vmatpush1.msra.mxu0 %v1254
        %1267 = vmatprep.subr.mxu0 0.0
        %1268 = vmatpush1.msra.mxu0 %v1256
        %1269 = vmatprep.subr.mxu0 0.0
        %1270 = vmatpush1.msra.mxu0 0.0
        %1271 = vmatprep.subr.mxu0 0.0
        %1272 = vmatpush1.msra.mxu0 0.0
        %1273 = vmatprep.subr.mxu0 0.0
        %1274 = vmatpush1.msra.mxu0 0.0
        %1275 = vmatprep.subr.mxu0 0.0
        %1276 = vmatpush1.msra.mxu0 0.0
        %1277 = vmatprep.subr.mxu0 0.0
        %1278 = vmatpush1.msra.mxu0 0.0
        %1279 = vmatprep.subr.mxu0 0.0
        %1280 = vmatpush1.msra.mxu0 0.0
        %1281 = vmatprep.subr.mxu0 0.0
        %1282 = vmatpush1.msra.mxu0 0.0
        %1283 = vmatprep.subr.mxu0 0.0
        %1284 = vmatpush1.msra.mxu0 0.0
        %1285 = vmatprep.subr.mxu0 0.0
        %1286 = vmatpush1.msra.mxu0 0.0
        %1287 = vmatprep.subr.mxu0 0.0
        %1288 = vmatpush1.msra.mxu0 0.0
        %1289 = vmatprep.subr.mxu0 0.0
        %1290 = vmatpush1.msra.mxu0 0.0
        %1291 = vmatprep.subr.mxu0 0.0
        %1292 = vmatpush1.msra.mxu0 0.0
        %1293 = vmatprep.subr.mxu0 0.0
        %1294 = vmatpush1.msra.mxu0 0.0
        %1295 = vmatprep.subr.mxu0 0.0
        %1296 = vmatpush1.msra.mxu0 0.0
        %1297 = vmatprep.subr.mxu0 0.0
        %1298 = vmatpush1.msra.mxu0 0.0
        %1299 = vmatprep.subr.mxu0 0.0
        %1300 = vmatpush1.msra.mxu0 0.0
        %1301 = vmatprep.subr.mxu0 0.0
        %1302 = vmatpush1.msra.mxu0 0.0
        %1303 = vmatprep.subr.mxu0 0.0
        %1304 = vmatpush1.msra.mxu0 0.0
        %1305 = vmatprep.subr.mxu0 0.0
        %1306 = vmatpush1.msra.mxu0 0.0
        %1307 = vmatprep.subr.mxu0 0.0
        %1308 = vmatpush1.msra.mxu0 0.0
        %1309 = vmatprep.subr.mxu0 0.0
        %1310 = vmatpush1.msra.mxu0 0.0
        %1311 = vmatprep.subr.mxu0 0.0
        %1312 = vmatpush1.msra.mxu0 0.0
        %1313 = vmatprep.subr.mxu0 0.0
        %1314 = vmatpush1.msra.mxu0 0.0
        %1315 = vmatprep.subr.mxu0 0.0
        %1316 = vmatpush1.msra.mxu0 0.0
        %1317 = vmatprep.subr.mxu0 0.0
        %1318 = vmatpush1.msra.mxu0 0.0
        %1319 = vmatprep.subr.mxu0 0.0
        %1320 = vmatpush1.msra.mxu0 0.0
        %1321 = vmatprep.subr.mxu0 0.0
        %1322 = vmatpush1.msra.mxu0 0.0
        %1323 = vmatprep.subr.mxu0 0.0
        %1324 = vmatpush1.msra.mxu0 0.0
        %1325 = vmatprep.subr.mxu0 0.0
        %1326 = vmatpush1.msra.mxu0 0.0
        %1327 = vmatprep.subr.mxu0 0.0
        %1328 = vmatpush1.msra.mxu0 0.0
        %1329 = vmatprep.mubr.f32.mxu0 0.0
        %1330 = vmatmul.mubr.f32.gmra.mrb[0].mxu0 %v1260
        %v1331 = vpop.f32.mrb[0].mxu0
        %v1332 = vadd.f32 0.0, %v1331
        %v1333 = vpop.f32.mrb[0].mxu0
        %1334 = vmatprep.mubr.f32.mxu0 0.0
        %1335 = vmatmul.mubr.f32.gmra.mrb[0].mxu0 %v1263
        %v1336 = vpop.f32.mrb[0].mxu0
        %v1337 = vadd.f32 0.0, %v1336
        %v1338 = vpop.f32.mrb[0].mxu0
        %1339 = vdwg.mxu0
        %1340 = vrot.lane.b32.xlu0 %v719, 80
        %v1341 = vpop.permute.xlu0 %1340
        %1342 = vrot.lane.b32.xlu0 %v720, 80
        %v1343 = vpop.permute.xlu0 %1342
        %1344 = vrot.lane.b32.xlu0 %v525, 80
        %v1345 = vpop.permute.xlu0 %1344
        %1346 = vrot.lane.b32.xlu0 %v530, 80
        %v1347 = vpop.permute.xlu0 %1346
        %v1348 = vsel %vm741, %v1341, 0
        %v1350 = vsel %vm741, %v1343, 0
        %v1352 = vsel %vm741, %v1345, 0
        %v1354 = vsel %vm741, %v1347, 0
        %1356 = vmatprep.subr.mxu0 0.0
        %1357 = vmatpush1.xpose.msra.mxu0 %v1352
        %1358 = vmatprep.subr.mxu0 0.0
        %1359 = vmatpush1.xpose.msra.mxu0 %v1354
        %1360 = vmatprep.subr.mxu0 0.0
        %1361 = vmatpush1.xpose.msra.mxu0 0.0
        %1362 = vmatprep.subr.mxu0 0.0
        %1363 = vmatpush1.xpose.msra.mxu0 0.0
        %1364 = vmatprep.subr.mxu0 0.0
        %1365 = vmatpush1.xpose.msra.mxu0 0.0
        %1366 = vmatprep.subr.mxu0 0.0
        %1367 = vmatpush1.xpose.msra.mxu0 0.0
        %1368 = vmatprep.subr.mxu0 0.0
        %1369 = vmatpush1.xpose.msra.mxu0 0.0
        %1370 = vmatprep.subr.mxu0 0.0
        %1371 = vmatpush1.xpose.msra.mxu0 0.0
        %1372 = vmatprep.subr.mxu0 0.0
        %1373 = vmatpush1.xpose.msra.mxu0 0.0
        %1374 = vmatprep.subr.mxu0 0.0
        %1375 = vmatpush1.xpose.msra.mxu0 0.0
        %1376 = vmatprep.subr.mxu0 0.0
        %1377 = vmatpush1.xpose.msra.mxu0 0.0
        %1378 = vmatprep.subr.mxu0 0.0
        %1379 = vmatpush1.xpose.msra.mxu0 0.0
        %1380 = vmatprep.subr.mxu0 0.0
        %1381 = vmatpush1.xpose.msra.mxu0 0.0
        %1382 = vmatprep.subr.mxu0 0.0
        %1383 = vmatpush1.xpose.msra.mxu0 0.0
        %1384 = vmatprep.subr.mxu0 0.0
        %1385 = vmatpush1.xpose.msra.mxu0 0.0
        %1386 = vmatprep.subr.mxu0 0.0
        %1387 = vmatpush1.xpose.msra.mxu0 0.0
        %1388 = vmatprep.subr.mxu0 0.0
        %1389 = vmatpush1.xpose.msra.mxu0 0.0
        %1390 = vmatprep.subr.mxu0 0.0
        %1391 = vmatpush1.xpose.msra.mxu0 0.0
        %1392 = vmatprep.subr.mxu0 0.0
        %1393 = vmatpush1.xpose.msra.mxu0 0.0
        %1394 = vmatprep.subr.mxu0 0.0
        %1395 = vmatpush1.xpose.msra.mxu0 0.0
        %1396 = vmatprep.subr.mxu0 0.0
        %1397 = vmatpush1.xpose.msra.mxu0 0.0
        %1398 = vmatprep.subr.mxu0 0.0
        %1399 = vmatpush1.xpose.msra.mxu0 0.0
        %1400 = vmatprep.subr.mxu0 0.0
        %1401 = vmatpush1.xpose.msra.mxu0 0.0
        %1402 = vmatprep.subr.mxu0 0.0
        %1403 = vmatpush1.xpose.msra.mxu0 0.0
        %1404 = vmatprep.subr.mxu0 0.0
        %1405 = vmatpush1.xpose.msra.mxu0 0.0
        %1406 = vmatprep.subr.mxu0 0.0
        %1407 = vmatpush1.xpose.msra.mxu0 0.0
        %1408 = vmatprep.subr.mxu0 0.0
        %1409 = vmatpush1.xpose.msra.mxu0 0.0
        %1410 = vmatprep.subr.mxu0 0.0
        %1411 = vmatpush1.xpose.msra.mxu0 0.0
        %1412 = vmatprep.subr.mxu0 0.0
        %1413 = vmatpush1.xpose.msra.mxu0 0.0
        %1414 = vmatprep.subr.mxu0 0.0
        %1415 = vmatpush1.xpose.msra.mxu0 0.0
        %1416 = vmatprep.subr.mxu0 0.0
        %1417 = vmatpush1.xpose.msra.mxu0 0.0
        %1418 = vmatprep.subr.mxu0 0.0
        %1419 = vmatpush1.xpose.msra.mxu0 0.0
        %1420 = vmatprep.mubr.f32.mxu0 0.0
        %1421 = vmatmul.mubr.f32.gmra.mrb[0].mxu0 %v1348
        %v1422 = vpop.f32.mrb[0].mxu0
        %v1423 = vadd.f32 0.0, %v1422
        %v1424 = vpop.f32.mrb[0].mxu0
        %1425 = vmatprep.mubr.f32.mxu0 0.0
        %1426 = vmatmul.mubr.f32.gmra.mrb[0].mxu0 %v1350
        %v1427 = vpop.f32.mrb[0].mxu0
        %v1428 = vadd.f32 0.0, %v1427
        %v1429 = vpop.f32.mrb[0].mxu0
        %1430 = vdwg.mxu0
        %v1431 = vsel %vm739, %v1423, -1e+30
        %v1432 = vsel %vm740, %v1428, -1e+30
        %v1433 = vsel %vm741, %v1431, -inf
        %1434 = vmax.xlane.f32.xlu0 %v1433
        %v1435 = vpop.xlane.xlu0 %1434
        %v1436 = vsel %vm741, %v1432, -inf
        %1437 = vmax.xlane.f32.xlu0 %v1436
        %v1438 = vpop.xlane.xlu0 %1437
        %v1439 = vsub.f32 %v1431, %v1435
        %v1440 = vsub.f32 %v1432, %v1438
        %v1441 = vmul.f32 %v1439, 1.442695
        %v1442 = vpow.pop %v1441
        %v1443 = vmul.f32 %v1440, 1.442695
        %v1444 = vpow.pop %v1443
        %v1445 = vsel %vm741, %v1442, 0.0
        %1446 = vadd.xlane.f32.xlu0 %v1445
        %v1447 = vpop.xlane.xlu0 %1446
        %v1448 = vsel %vm741, %v1444, 0.0
        %1449 = vadd.xlane.f32.xlu0 %v1448
        %v1450 = vpop.xlane.xlu0 %1449
        %v1451 = vrcp.pop %v1447
        %v1452 = vrcp.pop %v1450
        %v1453 = vmul.f32 %v1442, %v1451
        %v1454 = vmul.f32 %v1444, %v1452
        %1455 = vrot.lane.b32.xlu0 %v615, 80
        %v1456 = vpop.permute.xlu0 %1455
        %1457 = vrot.lane.b32.xlu0 %v620, 80
        %v1458 = vpop.permute.xlu0 %1457
        %v1462 = vsel %vm741, %v1453, 0
        %v1465 = vsel %vm741, %v1454, 0
        %1467 = vmatprep.subr.mxu0 0.0
        %1468 = vmatpush1.msra.mxu0 %v1456
        %1469 = vmatprep.subr.mxu0 0.0
        %1470 = vmatpush1.msra.mxu0 %v1458
        %1471 = vmatprep.subr.mxu0 0.0
        %1472 = vmatpush1.msra.mxu0 0.0
        %1473 = vmatprep.subr.mxu0 0.0
        %1474 = vmatpush1.msra.mxu0 0.0
        %1475 = vmatprep.subr.mxu0 0.0
        %1476 = vmatpush1.msra.mxu0 0.0
        %1477 = vmatprep.subr.mxu0 0.0
        %1478 = vmatpush1.msra.mxu0 0.0
        %1479 = vmatprep.subr.mxu0 0.0
        %1480 = vmatpush1.msra.mxu0 0.0
        %1481 = vmatprep.subr.mxu0 0.0
        %1482 = vmatpush1.msra.mxu0 0.0
        %1483 = vmatprep.subr.mxu0 0.0
        %1484 = vmatpush1.msra.mxu0 0.0
        %1485 = vmatprep.subr.mxu0 0.0
        %1486 = vmatpush1.msra.mxu0 0.0
        %1487 = vmatprep.subr.mxu0 0.0
        %1488 = vmatpush1.msra.mxu0 0.0
        %1489 = vmatprep.subr.mxu0 0.0
        %1490 = vmatpush1.msra.mxu0 0.0
        %1491 = vmatprep.subr.mxu0 0.0
        %1492 = vmatpush1.msra.mxu0 0.0
        %1493 = vmatprep.subr.mxu0 0.0
        %1494 = vmatpush1.msra.mxu0 0.0
        %1495 = vmatprep.subr.mxu0 0.0
        %1496 = vmatpush1.msra.mxu0 0.0
        %1497 = vmatprep.subr.mxu0 0.0
        %1498 = vmatpush1.msra.mxu0 0.0
        %1499 = vmatprep.subr.mxu0 0.0
        %1500 = vmatpush1.msra.mxu0 0.0
        %1501 = vmatprep.subr.mxu0 0.0
        %1502 = vmatpush1.msra.mxu0 0.0
        %1503 = vmatprep.subr.mxu0 0.0
        %1504 = vmatpush1.msra.mxu0 0.0
        %1505 = vmatprep.subr.mxu0 0.0
        %1506 = vmatpush1.msra.mxu0 0.0
        %1507 = vmatprep.subr.mxu0 0.0
        %1508 = vmatpush1.msra.mxu0 0.0
        %1509 = vmatprep.subr.mxu0 0.0
        %1510 = vmatpush1.msra.mxu0 0.0
        %1511 = vmatprep.subr.mxu0 0.0
        %1512 = vmatpush1.msra.mxu0 0.0
        %1513 = vmatprep.subr.mxu0 0.0
        %1514 = vmatpush1.msra.mxu0 0.0
        %1515 = vmatprep.subr.mxu0 0.0
        %1516 = vmatpush1.msra.mxu0 0.0
        %1517 = vmatprep.subr.mxu0 0.0
        %1518 = vmatpush1.msra.mxu0 0.0
        %1519 = vmatprep.subr.mxu0 0.0
        %1520 = vmatpush1.msra.mxu0 0.0
        %1521 = vmatprep.subr.mxu0 0.0
        %1522 = vmatpush1.msra.mxu0 0.0
        %1523 = vmatprep.subr.mxu0 0.0
        %1524 = vmatpush1.msra.mxu0 0.0
        %1525 = vmatprep.subr.mxu0 0.0
        %1526 = vmatpush1.msra.mxu0 0.0
        %1527 = vmatprep.subr.mxu0 0.0
        %1528 = vmatpush1.msra.mxu0 0.0
        %1529 = vmatprep.subr.mxu0 0.0
        %1530 = vmatpush1.msra.mxu0 0.0
        %1531 = vmatprep.mubr.f32.mxu0 0.0
        %1532 = vmatmul.mubr.f32.gmra.mrb[0].mxu0 %v1462
        %v1533 = vpop.f32.mrb[0].mxu0
        %v1534 = vadd.f32 0.0, %v1533
        %v1535 = vpop.f32.mrb[0].mxu0
        %1536 = vmatprep.mubr.f32.mxu0 0.0
        %1537 = vmatmul.mubr.f32.gmra.mrb[0].mxu0 %v1465
        %v1538 = vpop.f32.mrb[0].mxu0
        %v1539 = vadd.f32 0.0, %v1538
        %v1540 = vpop.f32.mrb[0].mxu0
        %1541 = vdwg.mxu0
        %1544 = vrot.lane.b32.xlu0 %v1130, 16
        %v1545 = vpop.permute.xlu0 %1544
        %1546 = vrot.lane.b32.xlu0 %v1135, 16
        %v1547 = vpop.permute.xlu0 %1546
        %1552 = vrot.lane.b32.xlu0 %v1332, 32
        %v1553 = vpop.permute.xlu0 %1552
        %1554 = vrot.lane.b32.xlu0 %v1337, 32
        %v1555 = vpop.permute.xlu0 %1554
        %1560 = vrot.lane.b32.xlu0 %v1534, 48
        %v1561 = vpop.permute.xlu0 %1560
        %1562 = vrot.lane.b32.xlu0 %v1539, 48
        %v1563 = vpop.permute.xlu0 %1562
        %v1566 = vsel %vm741, %v926, %v1545
        %v1567 = vsel %vm741, %v931, %v1547
        %vm1568 = vcmask 261120
        %v1569 = vsel %vm1568, %v1566, %v1553
        %v1570 = vsel %vm1568, %v1567, %v1555
        %vm1571 = vcmask 392192
        %v1572 = vsel %vm1571, %v1569, %v1561
        %v1573 = vsel %vm1571, %v1570, %v1563
        %v1574 = vld [vmem:[#allocation10] sm:$0xff]
        %v1575 = vld [vmem:[#allocation10 + $0x8] sm:$0xff]
        %v1576 = vld [vmem:[#allocation10 + $0x10] sm:$0xff]
        %v1577 = vld [vmem:[#allocation10 + $0x18] sm:$0xff]
        %v1578 = vld [vmem:[#allocation10 + $0x20] sm:$0xff]
        %v1579 = vld [vmem:[#allocation10 + $0x28] sm:$0xff]
        %v1580 = vld [vmem:[#allocation10 + $0x30] sm:$0xff]
        %v1581 = vld [vmem:[#allocation10 + $0x38] sm:$0xff]
        %v1582 = vld [vmem:[%s8] sm:$0x1]
        %v1584 = vlaneseq
        %v1585 = vshrl.u32 %v1584, 7
        %v1586 = vsub.s32 0, %v1585
        %v1587 = vrot.slane %v1582, %v1586
        %v1590 = vsel %vm451, %v1572, 0
        %v1593 = vsel %vm451, %v1573, 0
        %1595 = vmatprep.subr.mxu0 0.0
        %1596 = vmatpush1.msra.mxu0 %v1574
        %1597 = vmatprep.subr.mxu0 0.0
        %1598 = vmatpush1.msra.mxu0 %v1575
        %1599 = vmatprep.subr.mxu0 0.0
        %1600 = vmatpush1.msra.mxu0 %v1576
        %1601 = vmatprep.subr.mxu0 0.0
        %1602 = vmatpush1.msra.mxu0 %v1577
        %1603 = vmatprep.subr.mxu0 0.0
        %1604 = vmatpush1.msra.mxu0 %v1578
        %1605 = vmatprep.subr.mxu0 0.0
        %1606 = vmatpush1.msra.mxu0 %v1579
        %1607 = vmatprep.subr.mxu0 0.0
        %1608 = vmatpush1.msra.mxu0 %v1580
        %1609 = vmatprep.subr.mxu0 0.0
        %1610 = vmatpush1.msra.mxu0 %v1581
        %1611 = vmatprep.subr.mxu0 0.0
        %1612 = vmatpush1.msra.mxu0 0.0
        %1613 = vmatprep.subr.mxu0 0.0
        %1614 = vmatpush1.msra.mxu0 0.0
        %1615 = vmatprep.subr.mxu0 0.0
        %1616 = vmatpush1.msra.mxu0 0.0
        %1617 = vmatprep.subr.mxu0 0.0
        %1618 = vmatpush1.msra.mxu0 0.0
        %1619 = vmatprep.subr.mxu0 0.0
        %1620 = vmatpush1.msra.mxu0 0.0
        %1621 = vmatprep.subr.mxu0 0.0
        %1622 = vmatpush1.msra.mxu0 0.0
        %1623 = vmatprep.subr.mxu0 0.0
        %1624 = vmatpush1.msra.mxu0 0.0
        %1625 = vmatprep.subr.mxu0 0.0
        %1626 = vmatpush1.msra.mxu0 0.0
        %1627 = vmatprep.subr.mxu0 0.0
        %1628 = vmatpush1.msra.mxu0 0.0
        %1629 = vmatprep.subr.mxu0 0.0
        %1630 = vmatpush1.msra.mxu0 0.0
        %1631 = vmatprep.subr.mxu0 0.0
        %1632 = vmatpush1.msra.mxu0 0.0
        %1633 = vmatprep.subr.mxu0 0.0
        %1634 = vmatpush1.msra.mxu0 0.0
        %1635 = vmatprep.subr.mxu0 0.0
        %1636 = vmatpush1.msra.mxu0 0.0
        %1637 = vmatprep.subr.mxu0 0.0
        %1638 = vmatpush1.msra.mxu0 0.0
        %1639 = vmatprep.subr.mxu0 0.0
        %1640 = vmatpush1.msra.mxu0 0.0
        %1641 = vmatprep.subr.mxu0 0.0
        %1642 = vmatpush1.msra.mxu0 0.0
        %1643 = vmatprep.subr.mxu0 0.0
        %1644 = vmatpush1.msra.mxu0 0.0
        %1645 = vmatprep.subr.mxu0 0.0
        %1646 = vmatpush1.msra.mxu0 0.0
        %1647 = vmatprep.subr.mxu0 0.0
        %1648 = vmatpush1.msra.mxu0 0.0
        %1649 = vmatprep.subr.mxu0 0.0
        %1650 = vmatpush1.msra.mxu0 0.0
        %1651 = vmatprep.subr.mxu0 0.0
        %1652 = vmatpush1.msra.mxu0 0.0
        %1653 = vmatprep.subr.mxu0 0.0
        %1654 = vmatpush1.msra.mxu0 0.0
        %1655 = vmatprep.subr.mxu0 0.0
        %1656 = vmatpush1.msra.mxu0 0.0
        %1657 = vmatprep.subr.mxu0 0.0
        %1658 = vmatpush1.msra.mxu0 0.0
        %1659 = vmatprep.mubr.f32.mxu0 0.0
        %1660 = vmatmul.mubr.f32.gmra.mrb[0].mxu0 %v1590
        %v1661 = vpop.f32.mrb[0].mxu0
        %v1662 = vadd.f32 %v1587, %v1661
        %v1663 = vpop.f32.mrb[0].mxu0
        %1664 = vmatprep.mubr.f32.mxu0 0.0
        %1665 = vmatmul.mubr.f32.gmra.mrb[0].mxu0 %v1593
        %v1666 = vpop.f32.mrb[0].mxu0
        %v1667 = vadd.f32 %v1587, %v1666
        %v1668 = vpop.f32.mrb[0].mxu0
        %1669 = vdwg.mxu0
        %1670 = vst.msk [vmem:[%s422] sm:$0xff] %vm451, %v1662
        %1671 = vst.msk [vmem:[%s422 + $0x8] sm:$0xff] %vm451, %v1667
        %s1672 = sand.u32 %s244, 1
        %s1673 = scalar_lea.sflag [#allocation4], %s1672
        %s1674 = sand.u32 %s244, 1
        %s1675 = smul.addr %s1674, 16
        %s1676 = scalar_lea.vmem [#allocation11], %s1675
        // Predicated region
        $region77: #{tpu_custom_call.1} parent=55 // pred_check
          %p1677 = pneg %p254
        $region78: #{tpu_custom_call.1} parent=55 // pred_check_branch
          %1679 = sbr.rel (%p1677) target = $region80
        $region79: #{tpu_custom_call.1} parent=55 // pred_region
          %s1680 = smul.u32 2, %s33
          %s1682 = ssub.s32 256, 256
          %1683 = vsyncadd %s1673, %s1682
          %s1684 = smul.addr %s32, 2
          %s1685 = sadd.s32 %s1680, %s1684
          %s1686 = smul.addr %s1685, 128
          %s1687 = scalar_lea.hbm %s9, %s1686
          %s1688 = sshll.u32 %s1676, 4
          %s1689 = int_to_ptr.vmem [resolvable:$true] %s1688
          %1694 = dma.vmem_to_hbm [thread:$0]  %s1689, 256, %s1687, %s1673, 128, 128, 8
        $region80: #{tpu_custom_call.1} parent=55 // pred_fallthru
          _
      $region56: #{tpu_custom_call.1} parent=5 // pred_fallthru
        _
      %p1695 = scmp.le.s32.totalorder 2, %s23
      // Predicated region
      $region81: #{tpu_custom_call.1} parent=5 // pred_check
        %p1696 = pneg %p1695
      $region82: #{tpu_custom_call.1} parent=5 // pred_check_branch
        %1698 = sbr.rel (%p1696) target = $region84
      $region83: #{tpu_custom_call.1} parent=5 // pred_region
        %s1699 = ssub.s32 %s23, 2
        // Predicated region
        $region85: #{tpu_custom_call.1} parent=83 // pred_check
          %p1700 = pneg %p260
        $region86: #{tpu_custom_call.1} parent=83 // pred_check_branch
          %1702 = sbr.rel (%p1700) target = $region88
        $region87: #{tpu_custom_call.1} parent=83 // pred_region
          %s1703 = sand.u32 %s245, 1
          %s1704 = scalar_lea.sflag [#allocation4], %s1703
          %s1705 = sand.u32 %s245, 1
          %s1706 = smul.addr %s1705, 16
          %s1707 = scalar_lea.vmem [#allocation11], %s1706
          %1708 = dma.done %s1704, 256
        $region88: #{tpu_custom_call.1} parent=83 // pred_fallthru
          _
      $region84: #{tpu_custom_call.1} parent=5 // pred_fallthru
        _
    $region6: #{tpu_custom_call.1} parent=1 // loop_footer
      %s27 = sadd.s32 1, %s23
    $region7: #{tpu_custom_call.1} parent=1 // loop_footer_branch
      %22 = sbr.rel target = $region3
    $region8: #{tpu_custom_call.1} parent=1 // loop_exit
      _
    %1709 = vsyncpa [#allocation3], 1
    %s1710 = scalar_lea.sflag [#allocation3], 1
    %1711 = vsyncpa %s1710, 1
    %1712 = vsyncpa [#allocation6], 1
    %1713 = vsyncpa [#allocation9], 1
    %1714 = vsyncpa [#allocation4], 1
    %s1715 = scalar_lea.sflag [#allocation4], 1
    %1716 = vsyncpa %s1715, 1

</llo_original>
